<compile_context>
chip_gen: v5e
topology: v5e:2x2
jax: 0.10.0
libtpu: 0.0.40
codegen_flags: <defaults>
</compile_context>

<pallas_src>
import functools

import jax
import jax.numpy as jnp
import numpy as np
from jax.experimental import pallas as pl
from jax.experimental.pallas import tpu as pltpu

_R = 9  # max halo radius any stage reads (the 19-tap strip convs)


def _strip_block_kernel(x_ref, w0_ref, b0_ref, whb_ref, bh_ref, wv_ref, bv_ref,
                        w1_ref, b1_ref, o_ref, pad_ref, *, C, pad_rows, pad_cols):
    N, H, WC = x_ref.shape                       # whole batch resident in VMEM
    W = WC // C
    R = _R

    # ---- border-only halo zeroing (review item 1): zero just the strips the
    # stages read outside the interior.  Interiors are rewritten by every stage
    # and the halo is never written, so one pass serves the whole batch.
    # (No pl.when(program_id==0) tricks -- there is no grid.)
    halo_w = (W + 2 * R) * C
    col0 = (pad_cols - R) * C
    zrow = jnp.zeros((R, halo_w), jnp.float32)
    zcol = jnp.zeros((H, R * C), jnp.float32)
    pad_ref[pl.ds(pad_rows - R, R), pl.ds(col0, halo_w)] = zrow            # top
    pad_ref[pl.ds(pad_rows + H, R), pl.ds(col0, halo_w)] = zrow            # bottom
    pad_ref[pl.ds(pad_rows, H), pl.ds(col0, R * C)] = zcol                 # left
    pad_ref[pl.ds(pad_rows, H), pl.ds((pad_cols + W) * C, R * C)] = zcol   # right

    interior = (pl.ds(pad_rows, H), pl.ds(pad_cols * C, WC))               # aligned
    w0 = w0_ref[...]                              # (25, W*C) lane-tiled taps
    wv = wv_ref[...]                              # (19, W*C)

    for n in range(N):                            # batch folded into one call
        x = x_ref[n].astype(jnp.float32)
        pad_ref[interior] = x

        # conv0: depthwise 5x5, padding 2.  Taps grouped by dx (review item 5):
        # one lane-shifted slab load per dx, dy as cheap row slices of the slab.
        acc = jnp.broadcast_to(b0_ref[...], (H, WC))
        for dx in range(-2, 3):
            slab = pad_ref[pl.ds(pad_rows - 2, H + 4),
                           pl.ds((pad_cols + dx) * C, WC)]
            for dy in range(-2, 3):
                t = (dy + 2) * 5 + (dx + 2)
                acc = acc + slab[dy + 2:dy + 2 + H] * w0[t:t + 1]
        pad_ref[interior] = acc

        # strip_conv1: depthwise (1,19), padding (0,9) -- one banded
        # block-Toeplitz matmul on the (otherwise idle) MXU (review items 4/5).
        lhs = pad_ref[pl.ds(pad_rows, H), pl.ds(col0, halo_w)]   # (H, (W+18)*C)
        acc = jnp.dot(lhs, whb_ref[...],
                      preferred_element_type=jnp.float32) + bh_ref[...]
        pad_ref[interior] = acc

        # strip_conv2: depthwise (19,1), padding (9,0) -- lane-aligned,
        # sublane-shifted taps stay on the VALU.
        acc = jnp.broadcast_to(bv_ref[...], (H, WC))
        for t in range(2 * R + 1):
            tap = pad_ref[pl.ds(pad_rows + t - R, H), pl.ds(pad_cols * C, WC)]
            acc = acc + tap * wv[t:t + 1]

        # conv1: pointwise 1x1 == matmul with block-diagonal kron(I_W, w1^T).
        attn = jnp.dot(acc, w1_ref[...],
                       preferred_element_type=jnp.float32) + b1_ref[...]

        # gate: u * attn  (u is the unmodified input)
        o_ref[n] = (x * attn).astype(o_ref.dtype)


def strip_block(x_flat, params, *, C):
    """x_flat: (N, H, W*C) channel-minor (NHWC-flattened) input.
    params = (w0 (25,WC), b0 (1,WC), whb ((W+18)*C,WC), bh (1,WC),
              wv (19,WC), bv (1,WC), w1bd (WC,WC), b1 (1,WC))."""
    N, H, WC = x_flat.shape
    W = WC // C

    # Halo sizes: keep the interior *store* offsets (8,128)-aligned (shifted
    # loads at unaligned offsets are fine); only the <=9 rows/cols that are
    # actually read get zeroed, so the extra lane-alignment columns cost nothing.
    pad_rows = 16                                       # >= 9, multiple of 8
    pad_cols = _R
    if 128 % C == 0:
        unit = 128 // C
        pad_cols = -(-_R // unit) * unit                # >= 9, lane-aligned
    assert pad_rows >= _R and pad_cols >= _R

    kernel = functools.partial(_strip_block_kernel, C=C,
                               pad_rows=pad_rows, pad_cols=pad_cols)

    operands = (x_flat, *params)
    scratch_shape = (H + 2 * pad_rows, (W + 2 * pad_cols) * C)

    # Honest VMEM sizing (review): no grid, nothing is double-buffered, so size
    # the limit from the actual footprint plus generous margin.
    vmem_bytes = sum(int(np.prod(a.shape)) * a.dtype.itemsize for a in operands)
    vmem_bytes += int(np.prod(x_flat.shape)) * x_flat.dtype.itemsize      # output
    vmem_bytes += int(np.prod(scratch_shape)) * 4                         # scratch
    vmem_limit = int(max(8 * vmem_bytes, 4 * 1024 * 1024))

    return pl.pallas_call(
        kernel,
        out_shape=jax.ShapeDtypeStruct((N, H, WC), x_flat.dtype),
        scratch_shapes=[pltpu.VMEM(scratch_shape, jnp.float32)],
        compiler_params=pltpu.CompilerParams(vmem_limit_bytes=vmem_limit),
    )(*operands)


# ---------------- host-side parameter re-layout (glue only) ----------------
def torch_params_to_kernel(torch_params, W):
    w0_t, b0_t, wh_t, bh_t, wv_t, bv_t, w1_t, b1_t = torch_params
    C = w0_t.shape[0]
    WC = W * C
    R = _R

    def lane_tile(per_channel):                   # (..., C) -> (..., W*C)
        return jnp.tile(per_channel, (1,) * (per_channel.ndim - 1) + (W,))

    w0_k = lane_tile(jnp.transpose(w0_t[:, 0], (1, 2, 0)).reshape(25, C))
    wv_k = lane_tile(jnp.transpose(wv_t[:, 0, :, 0], (1, 0)))
    b0_k = jnp.tile(b0_t, W).reshape(1, WC)
    bh_k = jnp.tile(bh_t, W).reshape(1, WC)
    bv_k = jnp.tile(bv_t, W).reshape(1, WC)
    b1_k = jnp.tile(b1_t, W).reshape(1, WC)

    # Banded block-Toeplitz matrix for the (1,19) depthwise conv on the MXU:
    # out[:, j*C+c] = sum_t lhs[:, (j+t)*C+c] * wh[c, t], lhs = halo'd slab.
    wh_tc = np.asarray(wh_t)[:, 0, 0, :]                                  # (C, 19)
    whb = np.zeros(((W + 2 * R) * C, WC), np.float32)
    for t in range(2 * R + 1):
        for j in range(W):
            whb[(j + t) * C:(j + t + 1) * C, j * C:(j + 1) * C] = np.diag(wh_tc[:, t])

    # Block-diagonal 1x1-conv matrix: attn_flat = acc_flat @ kron(I_W, w1^T).
    w1_k = jnp.kron(jnp.eye(W, dtype=jnp.float32), jnp.asarray(w1_t)[:, :, 0, 0].T)

    return (w0_k, b0_k, jnp.asarray(whb), bh_k, wv_k, bv_k, w1_k, b1_k)


# ---------------- pure-JAX reference (PyTorch NCHW semantics) ----------------
def _conv_ref(x, w, b, padding, groups):
    out = jax.lax.conv_general_dilated(
        x, w, window_strides=(1, 1), padding=padding,
        dimension_numbers=("NCHW", "OIHW", "NCHW"), feature_group_count=groups,
        precision=jax.lax.Precision.HIGHEST)
    return out + b[None, :, None, None]


def strip_block_ref(x_nchw, torch_params):
    w0, b0, wh, bh, wv, bv, w1, b1 = torch_params
    C = x_nchw.shape[1]
    attn = _conv_ref(x_nchw, w0, b0, ((2, 2), (2, 2)), C)
    attn = _conv_ref(attn, wh, bh, ((0, 0), (9, 9)), C)
    attn = _conv_ref(attn, wv, bv, ((9, 9), (0, 0)), C)
    attn = _conv_ref(attn, w1, b1, ((0, 0), (0, 0)), 1)
    return x_nchw * attn


if __name__ == "__main__":
    N, dim, H, W = 2, 4, 16, 16
    keys = jax.random.split(jax.random.PRNGKey(0), 9)

    # PyTorch-shaped parameters (OIHW conv weights).
    w0_t = 0.1 * jax.random.normal(keys[0], (dim, 1, 5, 5), jnp.float32)
    b0_t = 0.1 * jax.random.normal(keys[1], (dim,), jnp.float32)
    wh_t = 0.1 * jax.random.normal(keys[2], (dim, 1, 1, 19), jnp.float32)
    bh_t = 0.1 * jax.random.normal(keys[3], (dim,), jnp.float32)
    wv_t = 0.1 * jax.random.normal(keys[4], (dim, 1, 19, 1), jnp.float32)
    bv_t = 0.1 * jax.random.normal(keys[5], (dim,), jnp.float32)
    w1_t = 0.1 * jax.random.normal(keys[6], (dim, dim, 1, 1), jnp.float32)
    b1_t = 0.1 * jax.random.normal(keys[7], (dim,), jnp.float32)
    x_nchw = jax.random.normal(keys[8], (N, dim, H, W), jnp.float32)

    torch_params = (w0_t, b0_t, wh_t, bh_t, wv_t, bv_t, w1_t, b1_t)
    kernel_params = torch_params_to_kernel(torch_params, W)

    x_flat = jnp.transpose(x_nchw, (0, 2, 3, 1)).reshape(N, H, W * dim)
    out_flat = jax.block_until_ready(strip_block(x_flat, kernel_params, C=dim))
    out_nchw = jnp.transpose(out_flat.reshape(N, H, W, dim), (0, 3, 1, 2))

    ref = strip_block_ref(x_nchw, torch_params)

    assert out_nchw.shape == x_nchw.shape and out_nchw.dtype == x_nchw.dtype
    # 1e-3 tolerance absorbs Mosaic's default f32 MXU contract precision on the
    # two matmuls (reference runs at Precision.HIGHEST); real layout/halo bugs
    # would be orders of magnitude larger.
    np.testing.assert_allclose(np.asarray(out_nchw), np.asarray(ref),
                               rtol=1e-3, atol=1e-3)
    print("KERNEL_OK")
</pallas_src>

<mosaic_0001>
module attributes {stable_mosaic.version = 11 : i64} {
  func.func @_strip_block_kernel(%arg0: memref<2x16x64xf32, #tpu.memory_space<vmem>>, %arg1: memref<25x64xf32, #tpu.memory_space<vmem>>, %arg2: memref<1x64xf32, #tpu.memory_space<vmem>>, %arg3: memref<136x64xf32, #tpu.memory_space<vmem>>, %arg4: memref<1x64xf32, #tpu.memory_space<vmem>>, %arg5: memref<19x64xf32, #tpu.memory_space<vmem>>, %arg6: memref<1x64xf32, #tpu.memory_space<vmem>>, %arg7: memref<64x64xf32, #tpu.memory_space<vmem>>, %arg8: memref<1x64xf32, #tpu.memory_space<vmem>>, %arg9: memref<2x16x64xf32, #tpu.memory_space<vmem>>, %arg10: memref<48x320xf32, #tpu.memory_space<vmem>>) attributes {dimension_semantics = [], scalar_prefetch = 0 : i64, scratch_operands = 1 : i64, tpu.core_type = #tpu.core_type<tc>} {
    %cst = arith.constant 0.000000e+00 : f32
    %0 = vector.broadcast %cst : f32 to vector<9x136xf32>
    %cst_0 = arith.constant 0.000000e+00 : f32
    %1 = vector.broadcast %cst_0 : f32 to vector<16x36xf32>
    %c7 = arith.constant 7 : index
    %c92 = arith.constant 92 : index
    %2 = vector.load %arg10[%c7, %c92] : memref<48x320xf32, #tpu.memory_space<vmem>>, vector<9x136xf32>
    tpu.vector_store %arg10[%c7, %c92], %0 {strides = array<i32>} : memref<48x320xf32, #tpu.memory_space<vmem>>, vector<9x136xf32>,
    %c32 = arith.constant 32 : index
    %c92_1 = arith.constant 92 : index
    %3 = vector.load %arg10[%c32, %c92_1] : memref<48x320xf32, #tpu.memory_space<vmem>>, vector<9x136xf32>
    tpu.vector_store %arg10[%c32, %c92_1], %0 {strides = array<i32>} : memref<48x320xf32, #tpu.memory_space<vmem>>, vector<9x136xf32>,
    %c16 = arith.constant 16 : index
    %c92_2 = arith.constant 92 : index
    %4 = vector.load %arg10[%c16, %c92_2] : memref<48x320xf32, #tpu.memory_space<vmem>>, vector<16x36xf32>
    tpu.vector_store %arg10[%c16, %c92_2], %1 {strides = array<i32>} : memref<48x320xf32, #tpu.memory_space<vmem>>, vector<16x36xf32>,
    %c16_3 = arith.constant 16 : index
    %c192 = arith.constant 192 : index
    %5 = vector.load %arg10[%c16_3, %c192] : memref<48x320xf32, #tpu.memory_space<vmem>>, vector<16x36xf32>
    tpu.vector_store %arg10[%c16_3, %c192], %1 {strides = array<i32>} : memref<48x320xf32, #tpu.memory_space<vmem>>, vector<16x36xf32>,
    %c0 = arith.constant 0 : index
    %c0_4 = arith.constant 0 : index
    %6 = vector.load %arg1[%c0, %c0_4] : memref<25x64xf32, #tpu.memory_space<vmem>>, vector<25x64xf32>
    %c0_5 = arith.constant 0 : index
    %c0_6 = arith.constant 0 : index
    %7 = vector.load %arg5[%c0_5, %c0_6] : memref<19x64xf32, #tpu.memory_space<vmem>>, vector<19x64xf32>
    %c0_7 = arith.constant 0 : index
    %c0_8 = arith.constant 0 : index
    %c0_9 = arith.constant 0 : index
    %8 = vector.load %arg0[%c0_7, %c0_8, %c0_9] : memref<2x16x64xf32, #tpu.memory_space<vmem>>, vector<1x16x64xf32>
    %9 = vector.shape_cast %8 : vector<1x16x64xf32> to vector<16x64xf32>
    %c16_10 = arith.constant 16 : index
    %c128 = arith.constant 128 : index
    %10 = vector.load %arg10[%c16_10, %c128] : memref<48x320xf32, #tpu.memory_space<vmem>>, vector<16x64xf32>
    tpu.vector_store %arg10[%c16_10, %c128], %9 {strides = array<i32>} : memref<48x320xf32, #tpu.memory_space<vmem>>, vector<16x64xf32>,
    %c0_11 = arith.constant 0 : index
    %c0_12 = arith.constant 0 : index
    %11 = vector.load %arg2[%c0_11, %c0_12] : memref<1x64xf32, #tpu.memory_space<vmem>>, vector<1x64xf32>
    %12 = vector.shape_cast %11 : vector<1x64xf32> to vector<1x64xf32>
    %13 = vector.broadcast %12 : vector<1x64xf32> to vector<16x64xf32>
    %c14 = arith.constant 14 : index
    %c120 = arith.constant 120 : index
    %14 = vector.load %arg10[%c14, %c120] : memref<48x320xf32, #tpu.memory_space<vmem>>, vector<20x64xf32>
    %15 = vector.extract_strided_slice %14 {offsets = [0, 0], sizes = [16, 64], strides = [1, 1]} : vector<20x64xf32> to vector<16x64xf32>
    %16 = vector.extract_strided_slice %6 {offsets = [0, 0], sizes = [1, 64], strides = [1, 1]} : vector<25x64xf32> to vector<1x64xf32>
    %17 = vector.broadcast %16 : vector<1x64xf32> to vector<16x64xf32>
    %18 = arith.mulf %15, %17 : vector<16x64xf32>
    %19 = arith.addf %13, %18 : vector<16x64xf32>
    %20 = vector.extract_strided_slice %14 {offsets = [1, 0], sizes = [16, 64], strides = [1, 1]} : vector<20x64xf32> to vector<16x64xf32>
    %21 = vector.extract_strided_slice %6 {offsets = [5, 0], sizes = [1, 64], strides = [1, 1]} : vector<25x64xf32> to vector<1x64xf32>
    %22 = vector.broadcast %21 : vector<1x64xf32> to vector<16x64xf32>
    %23 = arith.mulf %20, %22 : vector<16x64xf32>
    %24 = arith.addf %19, %23 : vector<16x64xf32>
    %25 = vector.extract_strided_slice %14 {offsets = [2, 0], sizes = [16, 64], strides = [1, 1]} : vector<20x64xf32> to vector<16x64xf32>
    %26 = vector.extract_strided_slice %6 {offsets = [10, 0], sizes = [1, 64], strides = [1, 1]} : vector<25x64xf32> to vector<1x64xf32>
    %27 = vector.broadcast %26 : vector<1x64xf32> to vector<16x64xf32>
    %28 = arith.mulf %25, %27 : vector<16x64xf32>
    %29 = arith.addf %24, %28 : vector<16x64xf32>
    %30 = vector.extract_strided_slice %14 {offsets = [3, 0], sizes = [16, 64], strides = [1, 1]} : vector<20x64xf32> to vector<16x64xf32>
    %31 = vector.extract_strided_slice %6 {offsets = [15, 0], sizes = [1, 64], strides = [1, 1]} : vector<25x64xf32> to vector<1x64xf32>
    %32 = vector.broadcast %31 : vector<1x64xf32> to vector<16x64xf32>
    %33 = arith.mulf %30, %32 : vector<16x64xf32>
    %34 = arith.addf %29, %33 : vector<16x64xf32>
    %35 = vector.extract_strided_slice %14 {offsets = [4, 0], sizes = [16, 64], strides = [1, 1]} : vector<20x64xf32> to vector<16x64xf32>
    %36 = vector.extract_strided_slice %6 {offsets = [20, 0], sizes = [1, 64], strides = [1, 1]} : vector<25x64xf32> to vector<1x64xf32>
    %37 = vector.broadcast %36 : vector<1x64xf32> to vector<16x64xf32>
    %38 = arith.mulf %35, %37 : vector<16x64xf32>
    %39 = arith.addf %34, %38 : vector<16x64xf32>
    %c14_13 = arith.constant 14 : index
    %c124 = arith.constant 124 : index
    %40 = vector.load %arg10[%c14_13, %c124] : memref<48x320xf32, #tpu.memory_space<vmem>>, vector<20x64xf32>
    %41 = vector.extract_strided_slice %40 {offsets = [0, 0], sizes = [16, 64], strides = [1, 1]} : vector<20x64xf32> to vector<16x64xf32>
    %42 = vector.extract_strided_slice %6 {offsets = [1, 0], sizes = [1, 64], strides = [1, 1]} : vector<25x64xf32> to vector<1x64xf32>
    %43 = vector.broadcast %42 : vector<1x64xf32> to vector<16x64xf32>
    %44 = arith.mulf %41, %43 : vector<16x64xf32>
    %45 = arith.addf %39, %44 : vector<16x64xf32>
    %46 = vector.extract_strided_slice %40 {offsets = [1, 0], sizes = [16, 64], strides = [1, 1]} : vector<20x64xf32> to vector<16x64xf32>
    %47 = vector.extract_strided_slice %6 {offsets = [6, 0], sizes = [1, 64], strides = [1, 1]} : vector<25x64xf32> to vector<1x64xf32>
    %48 = vector.broadcast %47 : vector<1x64xf32> to vector<16x64xf32>
    %49 = arith.mulf %46, %48 : vector<16x64xf32>
    %50 = arith.addf %45, %49 : vector<16x64xf32>
    %51 = vector.extract_strided_slice %40 {offsets = [2, 0], sizes = [16, 64], strides = [1, 1]} : vector<20x64xf32> to vector<16x64xf32>
    %52 = vector.extract_strided_slice %6 {offsets = [11, 0], sizes = [1, 64], strides = [1, 1]} : vector<25x64xf32> to vector<1x64xf32>
    %53 = vector.broadcast %52 : vector<1x64xf32> to vector<16x64xf32>
    %54 = arith.mulf %51, %53 : vector<16x64xf32>
    %55 = arith.addf %50, %54 : vector<16x64xf32>
    %56 = vector.extract_strided_slice %40 {offsets = [3, 0], sizes = [16, 64], strides = [1, 1]} : vector<20x64xf32> to vector<16x64xf32>
    %57 = vector.extract_strided_slice %6 {offsets = [16, 0], sizes = [1, 64], strides = [1, 1]} : vector<25x64xf32> to vector<1x64xf32>
    %58 = vector.broadcast %57 : vector<1x64xf32> to vector<16x64xf32>
    %59 = arith.mulf %56, %58 : vector<16x64xf32>
    %60 = arith.addf %55, %59 : vector<16x64xf32>
    %61 = vector.extract_strided_slice %40 {offsets = [4, 0], sizes = [16, 64], strides = [1, 1]} : vector<20x64xf32> to vector<16x64xf32>
    %62 = vector.extract_strided_slice %6 {offsets = [21, 0], sizes = [1, 64], strides = [1, 1]} : vector<25x64xf32> to vector<1x64xf32>
    %63 = vector.broadcast %62 : vector<1x64xf32> to vector<16x64xf32>
    %64 = arith.mulf %61, %63 : vector<16x64xf32>
    %65 = arith.addf %60, %64 : vector<16x64xf32>
    %c14_14 = arith.constant 14 : index
    %c128_15 = arith.constant 128 : index
    %66 = vector.load %arg10[%c14_14, %c128_15] : memref<48x320xf32, #tpu.memory_space<vmem>>, vector<20x64xf32>
    %67 = vector.extract_strided_slice %66 {offsets = [0, 0], sizes = [16, 64], strides = [1, 1]} : vector<20x64xf32> to vector<16x64xf32>
    %68 = vector.extract_strided_slice %6 {offsets = [2, 0], sizes = [1, 64], strides = [1, 1]} : vector<25x64xf32> to vector<1x64xf32>
    %69 = vector.broadcast %68 : vector<1x64xf32> to vector<16x64xf32>
    %70 = arith.mulf %67, %69 : vector<16x64xf32>
    %71 = arith.addf %65, %70 : vector<16x64xf32>
    %72 = vector.extract_strided_slice %66 {offsets = [1, 0], sizes = [16, 64], strides = [1, 1]} : vector<20x64xf32> to vector<16x64xf32>
    %73 = vector.extract_strided_slice %6 {offsets = [7, 0], sizes = [1, 64], strides = [1, 1]} : vector<25x64xf32> to vector<1x64xf32>
    %74 = vector.broadcast %73 : vector<1x64xf32> to vector<16x64xf32>
    %75 = arith.mulf %72, %74 : vector<16x64xf32>
    %76 = arith.addf %71, %75 : vector<16x64xf32>
    %77 = vector.extract_strided_slice %66 {offsets = [2, 0], sizes = [16, 64], strides = [1, 1]} : vector<20x64xf32> to vector<16x64xf32>
    %78 = vector.extract_strided_slice %6 {offsets = [12, 0], sizes = [1, 64], strides = [1, 1]} : vector<25x64xf32> to vector<1x64xf32>
    %79 = vector.broadcast %78 : vector<1x64xf32> to vector<16x64xf32>
    %80 = arith.mulf %77, %79 : vector<16x64xf32>
    %81 = arith.addf %76, %80 : vector<16x64xf32>
    %82 = vector.extract_strided_slice %66 {offsets = [3, 0], sizes = [16, 64], strides = [1, 1]} : vector<20x64xf32> to vector<16x64xf32>
    %83 = vector.extract_strided_slice %6 {offsets = [17, 0], sizes = [1, 64], strides = [1, 1]} : vector<25x64xf32> to vector<1x64xf32>
    %84 = vector.broadcast %83 : vector<1x64xf32> to vector<16x64xf32>
    %85 = arith.mulf %82, %84 : vector<16x64xf32>
    %86 = arith.addf %81, %85 : vector<16x64xf32>
    %87 = vector.extract_strided_slice %66 {offsets = [4, 0], sizes = [16, 64], strides = [1, 1]} : vector<20x64xf32> to vector<16x64xf32>
    %88 = vector.extract_strided_slice %6 {offsets = [22, 0], sizes = [1, 64], strides = [1, 1]} : vector<25x64xf32> to vector<1x64xf32>
    %89 = vector.broadcast %88 : vector<1x64xf32> to vector<16x64xf32>
    %90 = arith.mulf %87, %89 : vector<16x64xf32>
    %91 = arith.addf %86, %90 : vector<16x64xf32>
    %c14_16 = arith.constant 14 : index
    %c132 = arith.constant 132 : index
    %92 = vector.load %arg10[%c14_16, %c132] : memref<48x320xf32, #tpu.memory_space<vmem>>, vector<20x64xf32>
    %93 = vector.extract_strided_slice %92 {offsets = [0, 0], sizes = [16, 64], strides = [1, 1]} : vector<20x64xf32> to vector<16x64xf32>
    %94 = vector.extract_strided_slice %6 {offsets = [3, 0], sizes = [1, 64], strides = [1, 1]} : vector<25x64xf32> to vector<1x64xf32>
    %95 = vector.broadcast %94 : vector<1x64xf32> to vector<16x64xf32>
    %96 = arith.mulf %93, %95 : vector<16x64xf32>
    %97 = arith.addf %91, %96 : vector<16x64xf32>
    %98 = vector.extract_strided_slice %92 {offsets = [1, 0], sizes = [16, 64], strides = [1, 1]} : vector<20x64xf32> to vector<16x64xf32>
    %99 = vector.extract_strided_slice %6 {offsets = [8, 0], sizes = [1, 64], strides = [1, 1]} : vector<25x64xf32> to vector<1x64xf32>
    %100 = vector.broadcast %99 : vector<1x64xf32> to vector<16x64xf32>
    %101 = arith.mulf %98, %100 : vector<16x64xf32>
    %102 = arith.addf %97, %101 : vector<16x64xf32>
    %103 = vector.extract_strided_slice %92 {offsets = [2, 0], sizes = [16, 64], strides = [1, 1]} : vector<20x64xf32> to vector<16x64xf32>
    %104 = vector.extract_strided_slice %6 {offsets = [13, 0], sizes = [1, 64], strides = [1, 1]} : vector<25x64xf32> to vector<1x64xf32>
    %105 = vector.broadcast %104 : vector<1x64xf32> to vector<16x64xf32>
    %106 = arith.mulf %103, %105 : vector<16x64xf32>
    %107 = arith.addf %102, %106 : vector<16x64xf32>
    %108 = vector.extract_strided_slice %92 {offsets = [3, 0], sizes = [16, 64], strides = [1, 1]} : vector<20x64xf32> to vector<16x64xf32>
    %109 = vector.extract_strided_slice %6 {offsets = [18, 0], sizes = [1, 64], strides = [1, 1]} : vector<25x64xf32> to vector<1x64xf32>
    %110 = vector.broadcast %109 : vector<1x64xf32> to vector<16x64xf32>
    %111 = arith.mulf %108, %110 : vector<16x64xf32>
    %112 = arith.addf %107, %111 : vector<16x64xf32>
    %113 = vector.extract_strided_slice %92 {offsets = [4, 0], sizes = [16, 64], strides = [1, 1]} : vector<20x64xf32> to vector<16x64xf32>
    %114 = vector.extract_strided_slice %6 {offsets = [23, 0], sizes = [1, 64], strides = [1, 1]} : vector<25x64xf32> to vector<1x64xf32>
    %115 = vector.broadcast %114 : vector<1x64xf32> to vector<16x64xf32>
    %116 = arith.mulf %113, %115 : vector<16x64xf32>
    %117 = arith.addf %112, %116 : vector<16x64xf32>
    %c14_17 = arith.constant 14 : index
    %c136 = arith.constant 136 : index
    %118 = vector.load %arg10[%c14_17, %c136] : memref<48x320xf32, #tpu.memory_space<vmem>>, vector<20x64xf32>
    %119 = vector.extract_strided_slice %118 {offsets = [0, 0], sizes = [16, 64], strides = [1, 1]} : vector<20x64xf32> to vector<16x64xf32>
    %120 = vector.extract_strided_slice %6 {offsets = [4, 0], sizes = [1, 64], strides = [1, 1]} : vector<25x64xf32> to vector<1x64xf32>
    %121 = vector.broadcast %120 : vector<1x64xf32> to vector<16x64xf32>
    %122 = arith.mulf %119, %121 : vector<16x64xf32>
    %123 = arith.addf %117, %122 : vector<16x64xf32>
    %124 = vector.extract_strided_slice %118 {offsets = [1, 0], sizes = [16, 64], strides = [1, 1]} : vector<20x64xf32> to vector<16x64xf32>
    %125 = vector.extract_strided_slice %6 {offsets = [9, 0], sizes = [1, 64], strides = [1, 1]} : vector<25x64xf32> to vector<1x64xf32>
    %126 = vector.broadcast %125 : vector<1x64xf32> to vector<16x64xf32>
    %127 = arith.mulf %124, %126 : vector<16x64xf32>
    %128 = arith.addf %123, %127 : vector<16x64xf32>
    %129 = vector.extract_strided_slice %118 {offsets = [2, 0], sizes = [16, 64], strides = [1, 1]} : vector<20x64xf32> to vector<16x64xf32>
    %130 = vector.extract_strided_slice %6 {offsets = [14, 0], sizes = [1, 64], strides = [1, 1]} : vector<25x64xf32> to vector<1x64xf32>
    %131 = vector.broadcast %130 : vector<1x64xf32> to vector<16x64xf32>
    %132 = arith.mulf %129, %131 : vector<16x64xf32>
    %133 = arith.addf %128, %132 : vector<16x64xf32>
    %134 = vector.extract_strided_slice %118 {offsets = [3, 0], sizes = [16, 64], strides = [1, 1]} : vector<20x64xf32> to vector<16x64xf32>
    %135 = vector.extract_strided_slice %6 {offsets = [19, 0], sizes = [1, 64], strides = [1, 1]} : vector<25x64xf32> to vector<1x64xf32>
    %136 = vector.broadcast %135 : vector<1x64xf32> to vector<16x64xf32>
    %137 = arith.mulf %134, %136 : vector<16x64xf32>
    %138 = arith.addf %133, %137 : vector<16x64xf32>
    %139 = vector.extract_strided_slice %118 {offsets = [4, 0], sizes = [16, 64], strides = [1, 1]} : vector<20x64xf32> to vector<16x64xf32>
    %140 = vector.extract_strided_slice %6 {offsets = [24, 0], sizes = [1, 64], strides = [1, 1]} : vector<25x64xf32> to vector<1x64xf32>
    %141 = vector.broadcast %140 : vector<1x64xf32> to vector<16x64xf32>
    %142 = arith.mulf %139, %141 : vector<16x64xf32>
    %143 = arith.addf %138, %142 : vector<16x64xf32>
    %c16_18 = arith.constant 16 : index
    %c128_19 = arith.constant 128 : index
    %144 = vector.load %arg10[%c16_18, %c128_19] : memref<48x320xf32, #tpu.memory_space<vmem>>, vector<16x64xf32>
    tpu.vector_store %arg10[%c16_18, %c128_19], %143 {strides = array<i32>} : memref<48x320xf32, #tpu.memory_space<vmem>>, vector<16x64xf32>,
    %c16_20 = arith.constant 16 : index
    %c92_21 = arith.constant 92 : index
    %145 = vector.load %arg10[%c16_20, %c92_21] : memref<48x320xf32, #tpu.memory_space<vmem>>, vector<16x136xf32>
    %c0_22 = arith.constant 0 : index
    %c0_23 = arith.constant 0 : index
    %146 = vector.load %arg3[%c0_22, %c0_23] : memref<136x64xf32, #tpu.memory_space<vmem>>, vector<136x64xf32>
    %cst_24 = arith.constant dense<0.000000e+00> : vector<16x64xf32>
    %147 = tpu.matmul %145, %146, %cst_24 {dimension_numbers = #tpu.dot_dimension_numbers<[1], [0], [0], [1], [0, 0, 1, 1], [], []>} : vector<16x136xf32>, vector<136x64xf32>, vector<16x64xf32> -> vector<16x64xf32>
    %c0_25 = arith.constant 0 : index
    %c0_26 = arith.constant 0 : index
    %148 = vector.load %arg4[%c0_25, %c0_26] : memref<1x64xf32, #tpu.memory_space<vmem>>, vector<1x64xf32>
    %149 = vector.broadcast %148 : vector<1x64xf32> to vector<16x64xf32>
    %150 = arith.addf %147, %149 : vector<16x64xf32>
    %c16_27 = arith.constant 16 : index
    %c128_28 = arith.constant 128 : index
    %151 = vector.load %arg10[%c16_27, %c128_28] : memref<48x320xf32, #tpu.memory_space<vmem>>, vector<16x64xf32>
    tpu.vector_store %arg10[%c16_27, %c128_28], %150 {strides = array<i32>} : memref<48x320xf32, #tpu.memory_space<vmem>>, vector<16x64xf32>,
    %c0_29 = arith.constant 0 : index
    %c0_30 = arith.constant 0 : index
    %152 = vector.load %arg6[%c0_29, %c0_30] : memref<1x64xf32, #tpu.memory_space<vmem>>, vector<1x64xf32>
    %153 = vector.shape_cast %152 : vector<1x64xf32> to vector<1x64xf32>
    %154 = vector.broadcast %153 : vector<1x64xf32> to vector<16x64xf32>
    %c7_31 = arith.constant 7 : index
    %c128_32 = arith.constant 128 : index
    %155 = vector.load %arg10[%c7_31, %c128_32] : memref<48x320xf32, #tpu.memory_space<vmem>>, vector<16x64xf32>
    %156 = vector.extract_strided_slice %7 {offsets = [0, 0], sizes = [1, 64], strides = [1, 1]} : vector<19x64xf32> to vector<1x64xf32>
    %157 = vector.broadcast %156 : vector<1x64xf32> to vector<16x64xf32>
    %158 = arith.mulf %155, %157 : vector<16x64xf32>
    %159 = arith.addf %154, %158 : vector<16x64xf32>
    %c8 = arith.constant 8 : index
    %c128_33 = arith.constant 128 : index
    %160 = vector.load %arg10[%c8, %c128_33] : memref<48x320xf32, #tpu.memory_space<vmem>>, vector<16x64xf32>
    %161 = vector.extract_strided_slice %7 {offsets = [1, 0], sizes = [1, 64], strides = [1, 1]} : vector<19x64xf32> to vector<1x64xf32>
    %162 = vector.broadcast %161 : vector<1x64xf32> to vector<16x64xf32>
    %163 = arith.mulf %160, %162 : vector<16x64xf32>
    %164 = arith.addf %159, %163 : vector<16x64xf32>
    %c9 = arith.constant 9 : index
    %c128_34 = arith.constant 128 : index
    %165 = vector.load %arg10[%c9, %c128_34] : memref<48x320xf32, #tpu.memory_space<vmem>>, vector<16x64xf32>
    %166 = vector.extract_strided_slice %7 {offsets = [2, 0], sizes = [1, 64], strides = [1, 1]} : vector<19x64xf32> to vector<1x64xf32>
    %167 = vector.broadcast %166 : vector<1x64xf32> to vector<16x64xf32>
    %168 = arith.mulf %165, %167 : vector<16x64xf32>
    %169 = arith.addf %164, %168 : vector<16x64xf32>
    %c10 = arith.constant 10 : index
    %c128_35 = arith.constant 128 : index
    %170 = vector.load %arg10[%c10, %c128_35] : memref<48x320xf32, #tpu.memory_space<vmem>>, vector<16x64xf32>
    %171 = vector.extract_strided_slice %7 {offsets = [3, 0], sizes = [1, 64], strides = [1, 1]} : vector<19x64xf32> to vector<1x64xf32>
    %172 = vector.broadcast %171 : vector<1x64xf32> to vector<16x64xf32>
    %173 = arith.mulf %170, %172 : vector<16x64xf32>
    %174 = arith.addf %169, %173 : vector<16x64xf32>
    %c11 = arith.constant 11 : index
    %c128_36 = arith.constant 128 : index
    %175 = vector.load %arg10[%c11, %c128_36] : memref<48x320xf32, #tpu.memory_space<vmem>>, vector<16x64xf32>
    %176 = vector.extract_strided_slice %7 {offsets = [4, 0], sizes = [1, 64], strides = [1, 1]} : vector<19x64xf32> to vector<1x64xf32>
    %177 = vector.broadcast %176 : vector<1x64xf32> to vector<16x64xf32>
    %178 = arith.mulf %175, %177 : vector<16x64xf32>
    %179 = arith.addf %174, %178 : vector<16x64xf32>
    %c12 = arith.constant 12 : index
    %c128_37 = arith.constant 128 : index
    %180 = vector.load %arg10[%c12, %c128_37] : memref<48x320xf32, #tpu.memory_space<vmem>>, vector<16x64xf32>
    %181 = vector.extract_strided_slice %7 {offsets = [5, 0], sizes = [1, 64], strides = [1, 1]} : vector<19x64xf32> to vector<1x64xf32>
    %182 = vector.broadcast %181 : vector<1x64xf32> to vector<16x64xf32>
    %183 = arith.mulf %180, %182 : vector<16x64xf32>
    %184 = arith.addf %179, %183 : vector<16x64xf32>
    %c13 = arith.constant 13 : index
    %c128_38 = arith.constant 128 : index
    %185 = vector.load %arg10[%c13, %c128_38] : memref<48x320xf32, #tpu.memory_space<vmem>>, vector<16x64xf32>
    %186 = vector.extract_strided_slice %7 {offsets = [6, 0], sizes = [1, 64], strides = [1, 1]} : vector<19x64xf32> to vector<1x64xf32>
    %187 = vector.broadcast %186 : vector<1x64xf32> to vector<16x64xf32>
    %188 = arith.mulf %185, %187 : vector<16x64xf32>
    %189 = arith.addf %184, %188 : vector<16x64xf32>
    %c14_39 = arith.constant 14 : index
    %c128_40 = arith.constant 128 : index
    %190 = vector.load %arg10[%c14_39, %c128_40] : memref<48x320xf32, #tpu.memory_space<vmem>>, vector<16x64xf32>
    %191 = vector.extract_strided_slice %7 {offsets = [7, 0], sizes = [1, 64], strides = [1, 1]} : vector<19x64xf32> to vector<1x64xf32>
    %192 = vector.broadcast %191 : vector<1x64xf32> to vector<16x64xf32>
    %193 = arith.mulf %190, %192 : vector<16x64xf32>
    %194 = arith.addf %189, %193 : vector<16x64xf32>
    %c15 = arith.constant 15 : index
    %c128_41 = arith.constant 128 : index
    %195 = vector.load %arg10[%c15, %c128_41] : memref<48x320xf32, #tpu.memory_space<vmem>>, vector<16x64xf32>
    %196 = vector.extract_strided_slice %7 {offsets = [8, 0], sizes = [1, 64], strides = [1, 1]} : vector<19x64xf32> to vector<1x64xf32>
    %197 = vector.broadcast %196 : vector<1x64xf32> to vector<16x64xf32>
    %198 = arith.mulf %195, %197 : vector<16x64xf32>
    %199 = arith.addf %194, %198 : vector<16x64xf32>
    %c16_42 = arith.constant 16 : index
    %c128_43 = arith.constant 128 : index
    %200 = vector.load %arg10[%c16_42, %c128_43] : memref<48x320xf32, #tpu.memory_space<vmem>>, vector<16x64xf32>
    %201 = vector.extract_strided_slice %7 {offsets = [9, 0], sizes = [1, 64], strides = [1, 1]} : vector<19x64xf32> to vector<1x64xf32>
    %202 = vector.broadcast %201 : vector<1x64xf32> to vector<16x64xf32>
    %203 = arith.mulf %200, %202 : vector<16x64xf32>
    %204 = arith.addf %199, %203 : vector<16x64xf32>
    %c17 = arith.constant 17 : index
    %c128_44 = arith.constant 128 : index
    %205 = vector.load %arg10[%c17, %c128_44] : memref<48x320xf32, #tpu.memory_space<vmem>>, vector<16x64xf32>
    %206 = vector.extract_strided_slice %7 {offsets = [10, 0], sizes = [1, 64], strides = [1, 1]} : vector<19x64xf32> to vector<1x64xf32>
    %207 = vector.broadcast %206 : vector<1x64xf32> to vector<16x64xf32>
    %208 = arith.mulf %205, %207 : vector<16x64xf32>
    %209 = arith.addf %204, %208 : vector<16x64xf32>
    %c18 = arith.constant 18 : index
    %c128_45 = arith.constant 128 : index
    %210 = vector.load %arg10[%c18, %c128_45] : memref<48x320xf32, #tpu.memory_space<vmem>>, vector<16x64xf32>
    %211 = vector.extract_strided_slice %7 {offsets = [11, 0], sizes = [1, 64], strides = [1, 1]} : vector<19x64xf32> to vector<1x64xf32>
    %212 = vector.broadcast %211 : vector<1x64xf32> to vector<16x64xf32>
    %213 = arith.mulf %210, %212 : vector<16x64xf32>
    %214 = arith.addf %209, %213 : vector<16x64xf32>
    %c19 = arith.constant 19 : index
    %c128_46 = arith.constant 128 : index
    %215 = vector.load %arg10[%c19, %c128_46] : memref<48x320xf32, #tpu.memory_space<vmem>>, vector<16x64xf32>
    %216 = vector.extract_strided_slice %7 {offsets = [12, 0], sizes = [1, 64], strides = [1, 1]} : vector<19x64xf32> to vector<1x64xf32>
    %217 = vector.broadcast %216 : vector<1x64xf32> to vector<16x64xf32>
    %218 = arith.mulf %215, %217 : vector<16x64xf32>
    %219 = arith.addf %214, %218 : vector<16x64xf32>
    %c20 = arith.constant 20 : index
    %c128_47 = arith.constant 128 : index
    %220 = vector.load %arg10[%c20, %c128_47] : memref<48x320xf32, #tpu.memory_space<vmem>>, vector<16x64xf32>
    %221 = vector.extract_strided_slice %7 {offsets = [13, 0], sizes = [1, 64], strides = [1, 1]} : vector<19x64xf32> to vector<1x64xf32>
    %222 = vector.broadcast %221 : vector<1x64xf32> to vector<16x64xf32>
    %223 = arith.mulf %220, %222 : vector<16x64xf32>
    %224 = arith.addf %219, %223 : vector<16x64xf32>
    %c21 = arith.constant 21 : index
    %c128_48 = arith.constant 128 : index
    %225 = vector.load %arg10[%c21, %c128_48] : memref<48x320xf32, #tpu.memory_space<vmem>>, vector<16x64xf32>
    %226 = vector.extract_strided_slice %7 {offsets = [14, 0], sizes = [1, 64], strides = [1, 1]} : vector<19x64xf32> to vector<1x64xf32>
    %227 = vector.broadcast %226 : vector<1x64xf32> to vector<16x64xf32>
    %228 = arith.mulf %225, %227 : vector<16x64xf32>
    %229 = arith.addf %224, %228 : vector<16x64xf32>
    %c22 = arith.constant 22 : index
    %c128_49 = arith.constant 128 : index
    %230 = vector.load %arg10[%c22, %c128_49] : memref<48x320xf32, #tpu.memory_space<vmem>>, vector<16x64xf32>
    %231 = vector.extract_strided_slice %7 {offsets = [15, 0], sizes = [1, 64], strides = [1, 1]} : vector<19x64xf32> to vector<1x64xf32>
    %232 = vector.broadcast %231 : vector<1x64xf32> to vector<16x64xf32>
    %233 = arith.mulf %230, %232 : vector<16x64xf32>
    %234 = arith.addf %229, %233 : vector<16x64xf32>
    %c23 = arith.constant 23 : index
    %c128_50 = arith.constant 128 : index
    %235 = vector.load %arg10[%c23, %c128_50] : memref<48x320xf32, #tpu.memory_space<vmem>>, vector<16x64xf32>
    %236 = vector.extract_strided_slice %7 {offsets = [16, 0], sizes = [1, 64], strides = [1, 1]} : vector<19x64xf32> to vector<1x64xf32>
    %237 = vector.broadcast %236 : vector<1x64xf32> to vector<16x64xf32>
    %238 = arith.mulf %235, %237 : vector<16x64xf32>
    %239 = arith.addf %234, %238 : vector<16x64xf32>
    %c24 = arith.constant 24 : index
    %c128_51 = arith.constant 128 : index
    %240 = vector.load %arg10[%c24, %c128_51] : memref<48x320xf32, #tpu.memory_space<vmem>>, vector<16x64xf32>
    %241 = vector.extract_strided_slice %7 {offsets = [17, 0], sizes = [1, 64], strides = [1, 1]} : vector<19x64xf32> to vector<1x64xf32>
    %242 = vector.broadcast %241 : vector<1x64xf32> to vector<16x64xf32>
    %243 = arith.mulf %240, %242 : vector<16x64xf32>
    %244 = arith.addf %239, %243 : vector<16x64xf32>
    %c25 = arith.constant 25 : index
    %c128_52 = arith.constant 128 : index
    %245 = vector.load %arg10[%c25, %c128_52] : memref<48x320xf32, #tpu.memory_space<vmem>>, vector<16x64xf32>
    %246 = vector.extract_strided_slice %7 {offsets = [18, 0], sizes = [1, 64], strides = [1, 1]} : vector<19x64xf32> to vector<1x64xf32>
    %247 = vector.broadcast %246 : vector<1x64xf32> to vector<16x64xf32>
    %248 = arith.mulf %245, %247 : vector<16x64xf32>
    %249 = arith.addf %244, %248 : vector<16x64xf32>
    %c0_53 = arith.constant 0 : index
    %c0_54 = arith.constant 0 : index
    %250 = vector.load %arg7[%c0_53, %c0_54] : memref<64x64xf32, #tpu.memory_space<vmem>>, vector<64x64xf32>
    %cst_55 = arith.constant dense<0.000000e+00> : vector<16x64xf32>
    %251 = tpu.matmul %249, %250, %cst_55 {dimension_numbers = #tpu.dot_dimension_numbers<[1], [0], [0], [1], [0, 0, 1, 1], [], []>} : vector<16x64xf32>, vector<64x64xf32>, vector<16x64xf32> -> vector<16x64xf32>
    %c0_56 = arith.constant 0 : index
    %c0_57 = arith.constant 0 : index
    %252 = vector.load %arg8[%c0_56, %c0_57] : memref<1x64xf32, #tpu.memory_space<vmem>>, vector<1x64xf32>
    %253 = vector.broadcast %252 : vector<1x64xf32> to vector<16x64xf32>
    %254 = arith.addf %251, %253 : vector<16x64xf32>
    %255 = arith.mulf %9, %254 : vector<16x64xf32>
    %c0_58 = arith.constant 0 : index
    %c0_59 = arith.constant 0 : index
    %c0_60 = arith.constant 0 : index
    %256 = vector.load %arg9[%c0_58, %c0_59, %c0_60] : memref<2x16x64xf32, #tpu.memory_space<vmem>>, vector<1x16x64xf32>
    %257 = vector.shape_cast %256 : vector<1x16x64xf32> to vector<16x64xf32>
    %258 = vector.shape_cast %255 : vector<16x64xf32> to vector<1x16x64xf32>
    tpu.vector_store %arg9[%c0_58, %c0_59, %c0_60], %258 {strides = array<i32>} : memref<2x16x64xf32, #tpu.memory_space<vmem>>, vector<1x16x64xf32>,
    %c1 = arith.constant 1 : index
    %c0_61 = arith.constant 0 : index
    %c0_62 = arith.constant 0 : index
    %259 = vector.load %arg0[%c1, %c0_61, %c0_62] : memref<2x16x64xf32, #tpu.memory_space<vmem>>, vector<1x16x64xf32>
    %260 = vector.shape_cast %259 : vector<1x16x64xf32> to vector<16x64xf32>
    %c16_63 = arith.constant 16 : index
    %c128_64 = arith.constant 128 : index
    %261 = vector.load %arg10[%c16_63, %c128_64] : memref<48x320xf32, #tpu.memory_space<vmem>>, vector<16x64xf32>
    tpu.vector_store %arg10[%c16_63, %c128_64], %260 {strides = array<i32>} : memref<48x320xf32, #tpu.memory_space<vmem>>, vector<16x64xf32>,
    %c0_65 = arith.constant 0 : index
    %c0_66 = arith.constant 0 : index
    %262 = vector.load %arg2[%c0_65, %c0_66] : memref<1x64xf32, #tpu.memory_space<vmem>>, vector<1x64xf32>
    %263 = vector.shape_cast %262 : vector<1x64xf32> to vector<1x64xf32>
    %264 = vector.broadcast %263 : vector<1x64xf32> to vector<16x64xf32>
    %c14_67 = arith.constant 14 : index
    %c120_68 = arith.constant 120 : index
    %265 = vector.load %arg10[%c14_67, %c120_68] : memref<48x320xf32, #tpu.memory_space<vmem>>, vector<20x64xf32>
    %266 = vector.extract_strided_slice %265 {offsets = [0, 0], sizes = [16, 64], strides = [1, 1]} : vector<20x64xf32> to vector<16x64xf32>
    %267 = vector.extract_strided_slice %6 {offsets = [0, 0], sizes = [1, 64], strides = [1, 1]} : vector<25x64xf32> to vector<1x64xf32>
    %268 = vector.broadcast %267 : vector<1x64xf32> to vector<16x64xf32>
    %269 = arith.mulf %266, %268 : vector<16x64xf32>
    %270 = arith.addf %264, %269 : vector<16x64xf32>
    %271 = vector.extract_strided_slice %265 {offsets = [1, 0], sizes = [16, 64], strides = [1, 1]} : vector<20x64xf32> to vector<16x64xf32>
    %272 = vector.extract_strided_slice %6 {offsets = [5, 0], sizes = [1, 64], strides = [1, 1]} : vector<25x64xf32> to vector<1x64xf32>
    %273 = vector.broadcast %272 : vector<1x64xf32> to vector<16x64xf32>
    %274 = arith.mulf %271, %273 : vector<16x64xf32>
    %275 = arith.addf %270, %274 : vector<16x64xf32>
    %276 = vector.extract_strided_slice %265 {offsets = [2, 0], sizes = [16, 64], strides = [1, 1]} : vector<20x64xf32> to vector<16x64xf32>
    %277 = vector.extract_strided_slice %6 {offsets = [10, 0], sizes = [1, 64], strides = [1, 1]} : vector<25x64xf32> to vector<1x64xf32>
    %278 = vector.broadcast %277 : vector<1x64xf32> to vector<16x64xf32>
    %279 = arith.mulf %276, %278 : vector<16x64xf32>
    %280 = arith.addf %275, %279 : vector<16x64xf32>
    %281 = vector.extract_strided_slice %265 {offsets = [3, 0], sizes = [16, 64], strides = [1, 1]} : vector<20x64xf32> to vector<16x64xf32>
    %282 = vector.extract_strided_slice %6 {offsets = [15, 0], sizes = [1, 64], strides = [1, 1]} : vector<25x64xf32> to vector<1x64xf32>
    %283 = vector.broadcast %282 : vector<1x64xf32> to vector<16x64xf32>
    %284 = arith.mulf %281, %283 : vector<16x64xf32>
    %285 = arith.addf %280, %284 : vector<16x64xf32>
    %286 = vector.extract_strided_slice %265 {offsets = [4, 0], sizes = [16, 64], strides = [1, 1]} : vector<20x64xf32> to vector<16x64xf32>
    %287 = vector.extract_strided_slice %6 {offsets = [20, 0], sizes = [1, 64], strides = [1, 1]} : vector<25x64xf32> to vector<1x64xf32>
    %288 = vector.broadcast %287 : vector<1x64xf32> to vector<16x64xf32>
    %289 = arith.mulf %286, %288 : vector<16x64xf32>
    %290 = arith.addf %285, %289 : vector<16x64xf32>
    %c14_69 = arith.constant 14 : index
    %c124_70 = arith.constant 124 : index
    %291 = vector.load %arg10[%c14_69, %c124_70] : memref<48x320xf32, #tpu.memory_space<vmem>>, vector<20x64xf32>
    %292 = vector.extract_strided_slice %291 {offsets = [0, 0], sizes = [16, 64], strides = [1, 1]} : vector<20x64xf32> to vector<16x64xf32>
    %293 = vector.extract_strided_slice %6 {offsets = [1, 0], sizes = [1, 64], strides = [1, 1]} : vector<25x64xf32> to vector<1x64xf32>
    %294 = vector.broadcast %293 : vector<1x64xf32> to vector<16x64xf32>
    %295 = arith.mulf %292, %294 : vector<16x64xf32>
    %296 = arith.addf %290, %295 : vector<16x64xf32>
    %297 = vector.extract_strided_slice %291 {offsets = [1, 0], sizes = [16, 64], strides = [1, 1]} : vector<20x64xf32> to vector<16x64xf32>
    %298 = vector.extract_strided_slice %6 {offsets = [6, 0], sizes = [1, 64], strides = [1, 1]} : vector<25x64xf32> to vector<1x64xf32>
    %299 = vector.broadcast %298 : vector<1x64xf32> to vector<16x64xf32>
    %300 = arith.mulf %297, %299 : vector<16x64xf32>
    %301 = arith.addf %296, %300 : vector<16x64xf32>
    %302 = vector.extract_strided_slice %291 {offsets = [2, 0], sizes = [16, 64], strides = [1, 1]} : vector<20x64xf32> to vector<16x64xf32>
    %303 = vector.extract_strided_slice %6 {offsets = [11, 0], sizes = [1, 64], strides = [1, 1]} : vector<25x64xf32> to vector<1x64xf32>
    %304 = vector.broadcast %303 : vector<1x64xf32> to vector<16x64xf32>
    %305 = arith.mulf %302, %304 : vector<16x64xf32>
    %306 = arith.addf %301, %305 : vector<16x64xf32>
    %307 = vector.extract_strided_slice %291 {offsets = [3, 0], sizes = [16, 64], strides = [1, 1]} : vector<20x64xf32> to vector<16x64xf32>
    %308 = vector.extract_strided_slice %6 {offsets = [16, 0], sizes = [1, 64], strides = [1, 1]} : vector<25x64xf32> to vector<1x64xf32>
    %309 = vector.broadcast %308 : vector<1x64xf32> to vector<16x64xf32>
    %310 = arith.mulf %307, %309 : vector<16x64xf32>
    %311 = arith.addf %306, %310 : vector<16x64xf32>
    %312 = vector.extract_strided_slice %291 {offsets = [4, 0], sizes = [16, 64], strides = [1, 1]} : vector<20x64xf32> to vector<16x64xf32>
    %313 = vector.extract_strided_slice %6 {offsets = [21, 0], sizes = [1, 64], strides = [1, 1]} : vector<25x64xf32> to vector<1x64xf32>
    %314 = vector.broadcast %313 : vector<1x64xf32> to vector<16x64xf32>
    %315 = arith.mulf %312, %314 : vector<16x64xf32>
    %316 = arith.addf %311, %315 : vector<16x64xf32>
    %c14_71 = arith.constant 14 : index
    %c128_72 = arith.constant 128 : index
    %317 = vector.load %arg10[%c14_71, %c128_72] : memref<48x320xf32, #tpu.memory_space<vmem>>, vector<20x64xf32>
    %318 = vector.extract_strided_slice %317 {offsets = [0, 0], sizes = [16, 64], strides = [1, 1]} : vector<20x64xf32> to vector<16x64xf32>
    %319 = vector.extract_strided_slice %6 {offsets = [2, 0], sizes = [1, 64], strides = [1, 1]} : vector<25x64xf32> to vector<1x64xf32>
    %320 = vector.broadcast %319 : vector<1x64xf32> to vector<16x64xf32>
    %321 = arith.mulf %318, %320 : vector<16x64xf32>
    %322 = arith.addf %316, %321 : vector<16x64xf32>
    %323 = vector.extract_strided_slice %317 {offsets = [1, 0], sizes = [16, 64], strides = [1, 1]} : vector<20x64xf32> to vector<16x64xf32>
    %324 = vector.extract_strided_slice %6 {offsets = [7, 0], sizes = [1, 64], strides = [1, 1]} : vector<25x64xf32> to vector<1x64xf32>
    %325 = vector.broadcast %324 : vector<1x64xf32> to vector<16x64xf32>
    %326 = arith.mulf %323, %325 : vector<16x64xf32>
    %327 = arith.addf %322, %326 : vector<16x64xf32>
    %328 = vector.extract_strided_slice %317 {offsets = [2, 0], sizes = [16, 64], strides = [1, 1]} : vector<20x64xf32> to vector<16x64xf32>
    %329 = vector.extract_strided_slice %6 {offsets = [12, 0], sizes = [1, 64], strides = [1, 1]} : vector<25x64xf32> to vector<1x64xf32>
    %330 = vector.broadcast %329 : vector<1x64xf32> to vector<16x64xf32>
    %331 = arith.mulf %328, %330 : vector<16x64xf32>
    %332 = arith.addf %327, %331 : vector<16x64xf32>
    %333 = vector.extract_strided_slice %317 {offsets = [3, 0], sizes = [16, 64], strides = [1, 1]} : vector<20x64xf32> to vector<16x64xf32>
    %334 = vector.extract_strided_slice %6 {offsets = [17, 0], sizes = [1, 64], strides = [1, 1]} : vector<25x64xf32> to vector<1x64xf32>
    %335 = vector.broadcast %334 : vector<1x64xf32> to vector<16x64xf32>
    %336 = arith.mulf %333, %335 : vector<16x64xf32>
    %337 = arith.addf %332, %336 : vector<16x64xf32>
    %338 = vector.extract_strided_slice %317 {offsets = [4, 0], sizes = [16, 64], strides = [1, 1]} : vector<20x64xf32> to vector<16x64xf32>
    %339 = vector.extract_strided_slice %6 {offsets = [22, 0], sizes = [1, 64], strides = [1, 1]} : vector<25x64xf32> to vector<1x64xf32>
    %340 = vector.broadcast %339 : vector<1x64xf32> to vector<16x64xf32>
    %341 = arith.mulf %338, %340 : vector<16x64xf32>
    %342 = arith.addf %337, %341 : vector<16x64xf32>
    %c14_73 = arith.constant 14 : index
    %c132_74 = arith.constant 132 : index
    %343 = vector.load %arg10[%c14_73, %c132_74] : memref<48x320xf32, #tpu.memory_space<vmem>>, vector<20x64xf32>
    %344 = vector.extract_strided_slice %343 {offsets = [0, 0], sizes = [16, 64], strides = [1, 1]} : vector<20x64xf32> to vector<16x64xf32>
    %345 = vector.extract_strided_slice %6 {offsets = [3, 0], sizes = [1, 64], strides = [1, 1]} : vector<25x64xf32> to vector<1x64xf32>
    %346 = vector.broadcast %345 : vector<1x64xf32> to vector<16x64xf32>
    %347 = arith.mulf %344, %346 : vector<16x64xf32>
    %348 = arith.addf %342, %347 : vector<16x64xf32>
    %349 = vector.extract_strided_slice %343 {offsets = [1, 0], sizes = [16, 64], strides = [1, 1]} : vector<20x64xf32> to vector<16x64xf32>
    %350 = vector.extract_strided_slice %6 {offsets = [8, 0], sizes = [1, 64], strides = [1, 1]} : vector<25x64xf32> to vector<1x64xf32>
    %351 = vector.broadcast %350 : vector<1x64xf32> to vector<16x64xf32>
    %352 = arith.mulf %349, %351 : vector<16x64xf32>
    %353 = arith.addf %348, %352 : vector<16x64xf32>
    %354 = vector.extract_strided_slice %343 {offsets = [2, 0], sizes = [16, 64], strides = [1, 1]} : vector<20x64xf32> to vector<16x64xf32>
    %355 = vector.extract_strided_slice %6 {offsets = [13, 0], sizes = [1, 64], strides = [1, 1]} : vector<25x64xf32> to vector<1x64xf32>
    %356 = vector.broadcast %355 : vector<1x64xf32> to vector<16x64xf32>
    %357 = arith.mulf %354, %356 : vector<16x64xf32>
    %358 = arith.addf %353, %357 : vector<16x64xf32>
    %359 = vector.extract_strided_slice %343 {offsets = [3, 0], sizes = [16, 64], strides = [1, 1]} : vector<20x64xf32> to vector<16x64xf32>
    %360 = vector.extract_strided_slice %6 {offsets = [18, 0], sizes = [1, 64], strides = [1, 1]} : vector<25x64xf32> to vector<1x64xf32>
    %361 = vector.broadcast %360 : vector<1x64xf32> to vector<16x64xf32>
    %362 = arith.mulf %359, %361 : vector<16x64xf32>
    %363 = arith.addf %358, %362 : vector<16x64xf32>
    %364 = vector.extract_strided_slice %343 {offsets = [4, 0], sizes = [16, 64], strides = [1, 1]} : vector<20x64xf32> to vector<16x64xf32>
    %365 = vector.extract_strided_slice %6 {offsets = [23, 0], sizes = [1, 64], strides = [1, 1]} : vector<25x64xf32> to vector<1x64xf32>
    %366 = vector.broadcast %365 : vector<1x64xf32> to vector<16x64xf32>
    %367 = arith.mulf %364, %366 : vector<16x64xf32>
    %368 = arith.addf %363, %367 : vector<16x64xf32>
    %c14_75 = arith.constant 14 : index
    %c136_76 = arith.constant 136 : index
    %369 = vector.load %arg10[%c14_75, %c136_76] : memref<48x320xf32, #tpu.memory_space<vmem>>, vector<20x64xf32>
    %370 = vector.extract_strided_slice %369 {offsets = [0, 0], sizes = [16, 64], strides = [1, 1]} : vector<20x64xf32> to vector<16x64xf32>
    %371 = vector.extract_strided_slice %6 {offsets = [4, 0], sizes = [1, 64], strides = [1, 1]} : vector<25x64xf32> to vector<1x64xf32>
    %372 = vector.broadcast %371 : vector<1x64xf32> to vector<16x64xf32>
    %373 = arith.mulf %370, %372 : vector<16x64xf32>
    %374 = arith.addf %368, %373 : vector<16x64xf32>
    %375 = vector.extract_strided_slice %369 {offsets = [1, 0], sizes = [16, 64], strides = [1, 1]} : vector<20x64xf32> to vector<16x64xf32>
    %376 = vector.extract_strided_slice %6 {offsets = [9, 0], sizes = [1, 64], strides = [1, 1]} : vector<25x64xf32> to vector<1x64xf32>
    %377 = vector.broadcast %376 : vector<1x64xf32> to vector<16x64xf32>
    %378 = arith.mulf %375, %377 : vector<16x64xf32>
    %379 = arith.addf %374, %378 : vector<16x64xf32>
    %380 = vector.extract_strided_slice %369 {offsets = [2, 0], sizes = [16, 64], strides = [1, 1]} : vector<20x64xf32> to vector<16x64xf32>
    %381 = vector.extract_strided_slice %6 {offsets = [14, 0], sizes = [1, 64], strides = [1, 1]} : vector<25x64xf32> to vector<1x64xf32>
    %382 = vector.broadcast %381 : vector<1x64xf32> to vector<16x64xf32>
    %383 = arith.mulf %380, %382 : vector<16x64xf32>
    %384 = arith.addf %379, %383 : vector<16x64xf32>
    %385 = vector.extract_strided_slice %369 {offsets = [3, 0], sizes = [16, 64], strides = [1, 1]} : vector<20x64xf32> to vector<16x64xf32>
    %386 = vector.extract_strided_slice %6 {offsets = [19, 0], sizes = [1, 64], strides = [1, 1]} : vector<25x64xf32> to vector<1x64xf32>
    %387 = vector.broadcast %386 : vector<1x64xf32> to vector<16x64xf32>
    %388 = arith.mulf %385, %387 : vector<16x64xf32>
    %389 = arith.addf %384, %388 : vector<16x64xf32>
    %390 = vector.extract_strided_slice %369 {offsets = [4, 0], sizes = [16, 64], strides = [1, 1]} : vector<20x64xf32> to vector<16x64xf32>
    %391 = vector.extract_strided_slice %6 {offsets = [24, 0], sizes = [1, 64], strides = [1, 1]} : vector<25x64xf32> to vector<1x64xf32>
    %392 = vector.broadcast %391 : vector<1x64xf32> to vector<16x64xf32>
    %393 = arith.mulf %390, %392 : vector<16x64xf32>
    %394 = arith.addf %389, %393 : vector<16x64xf32>
    %c16_77 = arith.constant 16 : index
    %c128_78 = arith.constant 128 : index
    %395 = vector.load %arg10[%c16_77, %c128_78] : memref<48x320xf32, #tpu.memory_space<vmem>>, vector<16x64xf32>
    tpu.vector_store %arg10[%c16_77, %c128_78], %394 {strides = array<i32>} : memref<48x320xf32, #tpu.memory_space<vmem>>, vector<16x64xf32>,
    %c16_79 = arith.constant 16 : index
    %c92_80 = arith.constant 92 : index
    %396 = vector.load %arg10[%c16_79, %c92_80] : memref<48x320xf32, #tpu.memory_space<vmem>>, vector<16x136xf32>
    %c0_81 = arith.constant 0 : index
    %c0_82 = arith.constant 0 : index
    %397 = vector.load %arg3[%c0_81, %c0_82] : memref<136x64xf32, #tpu.memory_space<vmem>>, vector<136x64xf32>
    %cst_83 = arith.constant dense<0.000000e+00> : vector<16x64xf32>
    %398 = tpu.matmul %396, %397, %cst_83 {dimension_numbers = #tpu.dot_dimension_numbers<[1], [0], [0], [1], [0, 0, 1, 1], [], []>} : vector<16x136xf32>, vector<136x64xf32>, vector<16x64xf32> -> vector<16x64xf32>
    %c0_84 = arith.constant 0 : index
    %c0_85 = arith.constant 0 : index
    %399 = vector.load %arg4[%c0_84, %c0_85] : memref<1x64xf32, #tpu.memory_space<vmem>>, vector<1x64xf32>
    %400 = vector.broadcast %399 : vector<1x64xf32> to vector<16x64xf32>
    %401 = arith.addf %398, %400 : vector<16x64xf32>
    %c16_86 = arith.constant 16 : index
    %c128_87 = arith.constant 128 : index
    %402 = vector.load %arg10[%c16_86, %c128_87] : memref<48x320xf32, #tpu.memory_space<vmem>>, vector<16x64xf32>
    tpu.vector_store %arg10[%c16_86, %c128_87], %401 {strides = array<i32>} : memref<48x320xf32, #tpu.memory_space<vmem>>, vector<16x64xf32>,
    %c0_88 = arith.constant 0 : index
    %c0_89 = arith.constant 0 : index
    %403 = vector.load %arg6[%c0_88, %c0_89] : memref<1x64xf32, #tpu.memory_space<vmem>>, vector<1x64xf32>
    %404 = vector.shape_cast %403 : vector<1x64xf32> to vector<1x64xf32>
    %405 = vector.broadcast %404 : vector<1x64xf32> to vector<16x64xf32>
    %c7_90 = arith.constant 7 : index
    %c128_91 = arith.constant 128 : index
    %406 = vector.load %arg10[%c7_90, %c128_91] : memref<48x320xf32, #tpu.memory_space<vmem>>, vector<16x64xf32>
    %407 = vector.extract_strided_slice %7 {offsets = [0, 0], sizes = [1, 64], strides = [1, 1]} : vector<19x64xf32> to vector<1x64xf32>
    %408 = vector.broadcast %407 : vector<1x64xf32> to vector<16x64xf32>
    %409 = arith.mulf %406, %408 : vector<16x64xf32>
    %410 = arith.addf %405, %409 : vector<16x64xf32>
    %c8_92 = arith.constant 8 : index
    %c128_93 = arith.constant 128 : index
    %411 = vector.load %arg10[%c8_92, %c128_93] : memref<48x320xf32, #tpu.memory_space<vmem>>, vector<16x64xf32>
    %412 = vector.extract_strided_slice %7 {offsets = [1, 0], sizes = [1, 64], strides = [1, 1]} : vector<19x64xf32> to vector<1x64xf32>
    %413 = vector.broadcast %412 : vector<1x64xf32> to vector<16x64xf32>
    %414 = arith.mulf %411, %413 : vector<16x64xf32>
    %415 = arith.addf %410, %414 : vector<16x64xf32>
    %c9_94 = arith.constant 9 : index
    %c128_95 = arith.constant 128 : index
    %416 = vector.load %arg10[%c9_94, %c128_95] : memref<48x320xf32, #tpu.memory_space<vmem>>, vector<16x64xf32>
    %417 = vector.extract_strided_slice %7 {offsets = [2, 0], sizes = [1, 64], strides = [1, 1]} : vector<19x64xf32> to vector<1x64xf32>
    %418 = vector.broadcast %417 : vector<1x64xf32> to vector<16x64xf32>
    %419 = arith.mulf %416, %418 : vector<16x64xf32>
    %420 = arith.addf %415, %419 : vector<16x64xf32>
    %c10_96 = arith.constant 10 : index
    %c128_97 = arith.constant 128 : index
    %421 = vector.load %arg10[%c10_96, %c128_97] : memref<48x320xf32, #tpu.memory_space<vmem>>, vector<16x64xf32>
    %422 = vector.extract_strided_slice %7 {offsets = [3, 0], sizes = [1, 64], strides = [1, 1]} : vector<19x64xf32> to vector<1x64xf32>
    %423 = vector.broadcast %422 : vector<1x64xf32> to vector<16x64xf32>
    %424 = arith.mulf %421, %423 : vector<16x64xf32>
    %425 = arith.addf %420, %424 : vector<16x64xf32>
    %c11_98 = arith.constant 11 : index
    %c128_99 = arith.constant 128 : index
    %426 = vector.load %arg10[%c11_98, %c128_99] : memref<48x320xf32, #tpu.memory_space<vmem>>, vector<16x64xf32>
    %427 = vector.extract_strided_slice %7 {offsets = [4, 0], sizes = [1, 64], strides = [1, 1]} : vector<19x64xf32> to vector<1x64xf32>
    %428 = vector.broadcast %427 : vector<1x64xf32> to vector<16x64xf32>
    %429 = arith.mulf %426, %428 : vector<16x64xf32>
    %430 = arith.addf %425, %429 : vector<16x64xf32>
    %c12_100 = arith.constant 12 : index
    %c128_101 = arith.constant 128 : index
    %431 = vector.load %arg10[%c12_100, %c128_101] : memref<48x320xf32, #tpu.memory_space<vmem>>, vector<16x64xf32>
    %432 = vector.extract_strided_slice %7 {offsets = [5, 0], sizes = [1, 64], strides = [1, 1]} : vector<19x64xf32> to vector<1x64xf32>
    %433 = vector.broadcast %432 : vector<1x64xf32> to vector<16x64xf32>
    %434 = arith.mulf %431, %433 : vector<16x64xf32>
    %435 = arith.addf %430, %434 : vector<16x64xf32>
    %c13_102 = arith.constant 13 : index
    %c128_103 = arith.constant 128 : index
    %436 = vector.load %arg10[%c13_102, %c128_103] : memref<48x320xf32, #tpu.memory_space<vmem>>, vector<16x64xf32>
    %437 = vector.extract_strided_slice %7 {offsets = [6, 0], sizes = [1, 64], strides = [1, 1]} : vector<19x64xf32> to vector<1x64xf32>
    %438 = vector.broadcast %437 : vector<1x64xf32> to vector<16x64xf32>
    %439 = arith.mulf %436, %438 : vector<16x64xf32>
    %440 = arith.addf %435, %439 : vector<16x64xf32>
    %c14_104 = arith.constant 14 : index
    %c128_105 = arith.constant 128 : index
    %441 = vector.load %arg10[%c14_104, %c128_105] : memref<48x320xf32, #tpu.memory_space<vmem>>, vector<16x64xf32>
    %442 = vector.extract_strided_slice %7 {offsets = [7, 0], sizes = [1, 64], strides = [1, 1]} : vector<19x64xf32> to vector<1x64xf32>
    %443 = vector.broadcast %442 : vector<1x64xf32> to vector<16x64xf32>
    %444 = arith.mulf %441, %443 : vector<16x64xf32>
    %445 = arith.addf %440, %444 : vector<16x64xf32>
    %c15_106 = arith.constant 15 : index
    %c128_107 = arith.constant 128 : index
    %446 = vector.load %arg10[%c15_106, %c128_107] : memref<48x320xf32, #tpu.memory_space<vmem>>, vector<16x64xf32>
    %447 = vector.extract_strided_slice %7 {offsets = [8, 0], sizes = [1, 64], strides = [1, 1]} : vector<19x64xf32> to vector<1x64xf32>
    %448 = vector.broadcast %447 : vector<1x64xf32> to vector<16x64xf32>
    %449 = arith.mulf %446, %448 : vector<16x64xf32>
    %450 = arith.addf %445, %449 : vector<16x64xf32>
    %c16_108 = arith.constant 16 : index
    %c128_109 = arith.constant 128 : index
    %451 = vector.load %arg10[%c16_108, %c128_109] : memref<48x320xf32, #tpu.memory_space<vmem>>, vector<16x64xf32>
    %452 = vector.extract_strided_slice %7 {offsets = [9, 0], sizes = [1, 64], strides = [1, 1]} : vector<19x64xf32> to vector<1x64xf32>
    %453 = vector.broadcast %452 : vector<1x64xf32> to vector<16x64xf32>
    %454 = arith.mulf %451, %453 : vector<16x64xf32>
    %455 = arith.addf %450, %454 : vector<16x64xf32>
    %c17_110 = arith.constant 17 : index
    %c128_111 = arith.constant 128 : index
    %456 = vector.load %arg10[%c17_110, %c128_111] : memref<48x320xf32, #tpu.memory_space<vmem>>, vector<16x64xf32>
    %457 = vector.extract_strided_slice %7 {offsets = [10, 0], sizes = [1, 64], strides = [1, 1]} : vector<19x64xf32> to vector<1x64xf32>
    %458 = vector.broadcast %457 : vector<1x64xf32> to vector<16x64xf32>
    %459 = arith.mulf %456, %458 : vector<16x64xf32>
    %460 = arith.addf %455, %459 : vector<16x64xf32>
    %c18_112 = arith.constant 18 : index
    %c128_113 = arith.constant 128 : index
    %461 = vector.load %arg10[%c18_112, %c128_113] : memref<48x320xf32, #tpu.memory_space<vmem>>, vector<16x64xf32>
    %462 = vector.extract_strided_slice %7 {offsets = [11, 0], sizes = [1, 64], strides = [1, 1]} : vector<19x64xf32> to vector<1x64xf32>
    %463 = vector.broadcast %462 : vector<1x64xf32> to vector<16x64xf32>
    %464 = arith.mulf %461, %463 : vector<16x64xf32>
    %465 = arith.addf %460, %464 : vector<16x64xf32>
    %c19_114 = arith.constant 19 : index
    %c128_115 = arith.constant 128 : index
    %466 = vector.load %arg10[%c19_114, %c128_115] : memref<48x320xf32, #tpu.memory_space<vmem>>, vector<16x64xf32>
    %467 = vector.extract_strided_slice %7 {offsets = [12, 0], sizes = [1, 64], strides = [1, 1]} : vector<19x64xf32> to vector<1x64xf32>
    %468 = vector.broadcast %467 : vector<1x64xf32> to vector<16x64xf32>
    %469 = arith.mulf %466, %468 : vector<16x64xf32>
    %470 = arith.addf %465, %469 : vector<16x64xf32>
    %c20_116 = arith.constant 20 : index
    %c128_117 = arith.constant 128 : index
    %471 = vector.load %arg10[%c20_116, %c128_117] : memref<48x320xf32, #tpu.memory_space<vmem>>, vector<16x64xf32>
    %472 = vector.extract_strided_slice %7 {offsets = [13, 0], sizes = [1, 64], strides = [1, 1]} : vector<19x64xf32> to vector<1x64xf32>
    %473 = vector.broadcast %472 : vector<1x64xf32> to vector<16x64xf32>
    %474 = arith.mulf %471, %473 : vector<16x64xf32>
    %475 = arith.addf %470, %474 : vector<16x64xf32>
    %c21_118 = arith.constant 21 : index
    %c128_119 = arith.constant 128 : index
    %476 = vector.load %arg10[%c21_118, %c128_119] : memref<48x320xf32, #tpu.memory_space<vmem>>, vector<16x64xf32>
    %477 = vector.extract_strided_slice %7 {offsets = [14, 0], sizes = [1, 64], strides = [1, 1]} : vector<19x64xf32> to vector<1x64xf32>
    %478 = vector.broadcast %477 : vector<1x64xf32> to vector<16x64xf32>
    %479 = arith.mulf %476, %478 : vector<16x64xf32>
    %480 = arith.addf %475, %479 : vector<16x64xf32>
    %c22_120 = arith.constant 22 : index
    %c128_121 = arith.constant 128 : index
    %481 = vector.load %arg10[%c22_120, %c128_121] : memref<48x320xf32, #tpu.memory_space<vmem>>, vector<16x64xf32>
    %482 = vector.extract_strided_slice %7 {offsets = [15, 0], sizes = [1, 64], strides = [1, 1]} : vector<19x64xf32> to vector<1x64xf32>
    %483 = vector.broadcast %482 : vector<1x64xf32> to vector<16x64xf32>
    %484 = arith.mulf %481, %483 : vector<16x64xf32>
    %485 = arith.addf %480, %484 : vector<16x64xf32>
    %c23_122 = arith.constant 23 : index
    %c128_123 = arith.constant 128 : index
    %486 = vector.load %arg10[%c23_122, %c128_123] : memref<48x320xf32, #tpu.memory_space<vmem>>, vector<16x64xf32>
    %487 = vector.extract_strided_slice %7 {offsets = [16, 0], sizes = [1, 64], strides = [1, 1]} : vector<19x64xf32> to vector<1x64xf32>
    %488 = vector.broadcast %487 : vector<1x64xf32> to vector<16x64xf32>
    %489 = arith.mulf %486, %488 : vector<16x64xf32>
    %490 = arith.addf %485, %489 : vector<16x64xf32>
    %c24_124 = arith.constant 24 : index
    %c128_125 = arith.constant 128 : index
    %491 = vector.load %arg10[%c24_124, %c128_125] : memref<48x320xf32, #tpu.memory_space<vmem>>, vector<16x64xf32>
    %492 = vector.extract_strided_slice %7 {offsets = [17, 0], sizes = [1, 64], strides = [1, 1]} : vector<19x64xf32> to vector<1x64xf32>
    %493 = vector.broadcast %492 : vector<1x64xf32> to vector<16x64xf32>
    %494 = arith.mulf %491, %493 : vector<16x64xf32>
    %495 = arith.addf %490, %494 : vector<16x64xf32>
    %c25_126 = arith.constant 25 : index
    %c128_127 = arith.constant 128 : index
    %496 = vector.load %arg10[%c25_126, %c128_127] : memref<48x320xf32, #tpu.memory_space<vmem>>, vector<16x64xf32>
    %497 = vector.extract_strided_slice %7 {offsets = [18, 0], sizes = [1, 64], strides = [1, 1]} : vector<19x64xf32> to vector<1x64xf32>
    %498 = vector.broadcast %497 : vector<1x64xf32> to vector<16x64xf32>
    %499 = arith.mulf %496, %498 : vector<16x64xf32>
    %500 = arith.addf %495, %499 : vector<16x64xf32>
    %c0_128 = arith.constant 0 : index
    %c0_129 = arith.constant 0 : index
    %501 = vector.load %arg7[%c0_128, %c0_129] : memref<64x64xf32, #tpu.memory_space<vmem>>, vector<64x64xf32>
    %cst_130 = arith.constant dense<0.000000e+00> : vector<16x64xf32>
    %502 = tpu.matmul %500, %501, %cst_130 {dimension_numbers = #tpu.dot_dimension_numbers<[1], [0], [0], [1], [0, 0, 1, 1], [], []>} : vector<16x64xf32>, vector<64x64xf32>, vector<16x64xf32> -> vector<16x64xf32>
    %c0_131 = arith.constant 0 : index
    %c0_132 = arith.constant 0 : index
    %503 = vector.load %arg8[%c0_131, %c0_132] : memref<1x64xf32, #tpu.memory_space<vmem>>, vector<1x64xf32>
    %504 = vector.broadcast %503 : vector<1x64xf32> to vector<16x64xf32>
    %505 = arith.addf %502, %504 : vector<16x64xf32>
    %506 = arith.mulf %260, %505 : vector<16x64xf32>
    %c1_133 = arith.constant 1 : index
    %c0_134 = arith.constant 0 : index
    %c0_135 = arith.constant 0 : index
    %507 = vector.load %arg9[%c1_133, %c0_134, %c0_135] : memref<2x16x64xf32, #tpu.memory_space<vmem>>, vector<1x16x64xf32>
    %508 = vector.shape_cast %507 : vector<1x16x64xf32> to vector<16x64xf32>
    %509 = vector.shape_cast %506 : vector<16x64xf32> to vector<1x16x64xf32>
    tpu.vector_store %arg9[%c1_133, %c0_134, %c0_135], %509 {strides = array<i32>} : memref<2x16x64xf32, #tpu.memory_space<vmem>>, vector<1x16x64xf32>,
    return
  }
}

</mosaic_0001>

<llo_original>
// kernel: tpu_custom_call.1
$region0: #{tpu_custom_call.1}
  #allocation0 [shape = 'u32[]', space=smem, size = 0x4, offset = 0x4, fixed_abs, tag = 'smem constant byte address 0x4 - core index']
  #allocation1 [shape = 'u32[72,128]{1,0:T(1,128)}', space=vmem, size = 0x9000, scoped, tag = 'internal scratch']
  #allocation2 [shape = 'f32[48,320]{1,0:T(8,128)}', space=vmem, size = 0x12000, scoped, tag = 'scratch operand']
  %s0 = inlined_call_operand.vmem [shape: f32[2,16,64], index: 0, kind: input, shape index: {}]
  %s1 = inlined_call_operand.vmem [shape: f32[25,64], index: 1, kind: input, shape index: {}]
  %s2 = inlined_call_operand.vmem [shape: f32[1,64], index: 2, kind: input, shape index: {}]
  %s3 = inlined_call_operand.vmem [shape: f32[136,64], index: 3, kind: input, shape index: {}]
  %s4 = inlined_call_operand.vmem [shape: f32[1,64], index: 4, kind: input, shape index: {}]
  %s5 = inlined_call_operand.vmem [shape: f32[19,64], index: 5, kind: input, shape index: {}]
  %s6 = inlined_call_operand.vmem [shape: f32[1,64], index: 6, kind: input, shape index: {}]
  %s7 = inlined_call_operand.vmem [shape: f32[64,64], index: 7, kind: input, shape index: {}]
  %s8 = inlined_call_operand.vmem [shape: f32[1,64], index: 8, kind: input, shape index: {}]
  %s9 = inlined_call_operand.hbm [shape: f32[2,16,64], index: 9, kind: output, shape index: {}]
  %s10 = sld [smem:[#allocation0]]
  $region46: #{tpu_custom_call.1} parent=0
    _
  %s12 = ssub.s32 1, %s10
  %s13 = scalar_select 0, %s12, %s10
  $region1: #{tpu_custom_call.1} parent=0
    #allocation3 [shape = 'u8[16384]{0}', space=vmem, size = 0x4000, scoped, tag = 'output window, operand 0, single buffered']
    #allocation4 [shape = 's32[1]{0}', space=sflag, size = 0x4, scoped, tag = 'scoped memory for tpu_custom_call.1']
    %14 = vsyncpa [#allocation4], 0
    // Predicated region
    $region2: #{tpu_custom_call.1} parent=1 // pred_check
      _
    $region3: #{tpu_custom_call.1} parent=1 // pred_check_branch
      %16 = sbr.rel (0) target = $region5
    $region4: #{tpu_custom_call.1} parent=1 // pred_region
      _
    $region5: #{tpu_custom_call.1} parent=1 // pred_fallthru
      _
    // Predicated region
    $region6: #{tpu_custom_call.1} parent=1 // pred_check
      _
    $region7: #{tpu_custom_call.1} parent=1 // pred_check_branch
      %18 = sbr.rel (0) target = $region9
    $region8: #{tpu_custom_call.1} parent=1 // pred_region
      _
    $region9: #{tpu_custom_call.1} parent=1 // pred_fallthru
      _
    // Predicated region
    $region10: #{tpu_custom_call.1} parent=1 // pred_check
      _
    $region11: #{tpu_custom_call.1} parent=1 // pred_check_branch
      %20 = sbr.rel (0) target = $region13
    $region12: #{tpu_custom_call.1} parent=1 // pred_region
      _
    $region13: #{tpu_custom_call.1} parent=1 // pred_fallthru
      _
    // Predicated region
    $region14: #{tpu_custom_call.1} parent=1 // pred_check
      _
    $region15: #{tpu_custom_call.1} parent=1 // pred_check_branch
      %22 = sbr.rel (0) target = $region17
    $region16: #{tpu_custom_call.1} parent=1 // pred_region
      _
    $region17: #{tpu_custom_call.1} parent=1 // pred_fallthru
      _
    // Predicated region
    $region18: #{tpu_custom_call.1} parent=1 // pred_check
      _
    $region19: #{tpu_custom_call.1} parent=1 // pred_check_branch
      %24 = sbr.rel (0) target = $region21
    $region20: #{tpu_custom_call.1} parent=1 // pred_region
      _
    $region21: #{tpu_custom_call.1} parent=1 // pred_fallthru
      _
    // Predicated region
    $region22: #{tpu_custom_call.1} parent=1 // pred_check
      _
    $region23: #{tpu_custom_call.1} parent=1 // pred_check_branch
      %26 = sbr.rel (0) target = $region25
    $region24: #{tpu_custom_call.1} parent=1 // pred_region
      _
    $region25: #{tpu_custom_call.1} parent=1 // pred_fallthru
      _
    // Predicated region
    $region26: #{tpu_custom_call.1} parent=1 // pred_check
      _
    $region27: #{tpu_custom_call.1} parent=1 // pred_check_branch
      %28 = sbr.rel (0) target = $region29
    $region28: #{tpu_custom_call.1} parent=1 // pred_region
      _
    $region29: #{tpu_custom_call.1} parent=1 // pred_fallthru
      _
    // Predicated region
    $region30: #{tpu_custom_call.1} parent=1 // pred_check
      _
    $region31: #{tpu_custom_call.1} parent=1 // pred_check_branch
      %30 = sbr.rel (0) target = $region33
    $region32: #{tpu_custom_call.1} parent=1 // pred_region
      _
    $region33: #{tpu_custom_call.1} parent=1 // pred_fallthru
      _
    // Predicated region
    $region34: #{tpu_custom_call.1} parent=1 // pred_check
      _
    $region35: #{tpu_custom_call.1} parent=1 // pred_check_branch
      %32 = sbr.rel (0) target = $region37
    $region36: #{tpu_custom_call.1} parent=1 // pred_region
      _
    $region37: #{tpu_custom_call.1} parent=1 // pred_fallthru
      _
    %vm33 = vcmask 1048295
    %34 = vst.msk [vmem:[#allocation2] sm:$0x80] %vm33, 0.0
    %vm35 = vcmask 818183
    %36 = vst.msk [vmem:[#allocation2 + $0x8] sm:$0x80] %vm35, 0.0
    %vm37 = vcmask 1048288
    %38 = vst.msk [vmem:[#allocation2 + $0x18] sm:$0xff] %vm37, 0.0
    %vm39 = vcmask 818176
    %40 = vst.msk [vmem:[#allocation2 + $0x20] sm:$0xff] %vm39, 0.0
    %41 = vst.msk [vmem:[#allocation2 + $0x60] sm:$0xff] %vm37, 0.0
    %42 = vst.msk [vmem:[#allocation2 + $0x68] sm:$0xff] %vm39, 0.0
    %vm43 = vcmask 1041120
    %44 = vst.msk [vmem:[#allocation2 + $0x78] sm:$0x1] %vm43, 0.0
    %vm45 = vcmask 811008
    %46 = vst.msk [vmem:[#allocation2 + $0x80] sm:$0x1] %vm45, 0.0
    %47 = vst.msk [vmem:[#allocation2 + $0x30] sm:$0xff] %vm37, 0.0
    %48 = vst.msk [vmem:[#allocation2 + $0x48] sm:$0xff] %vm37, 0.0
    %vm49 = vcmask 818688
    %50 = vst.msk [vmem:[#allocation2 + $0x38] sm:$0xff] %vm49, 0.0
    %51 = vst.msk [vmem:[#allocation2 + $0x50] sm:$0xff] %vm49, 0.0
    %v52 = vld [vmem:[%s1] sm:$0xff]
    %v53 = vld [vmem:[%s1 + $0x8] sm:$0xff]
    %v54 = vld [vmem:[%s1 + $0x10] sm:$0xff]
    %v55 = vld [vmem:[%s1 + $0x18] sm:$0x1]
    %v56 = vld [vmem:[%s5] sm:$0xff]
    %v57 = vld [vmem:[%s5 + $0x8] sm:$0xff]
    %v58 = vld [vmem:[%s5 + $0x10] sm:$0x7]
    %v59 = vld [vmem:[%s0] sm:$0xff]
    %v60 = vld [vmem:[%s0 + $0x8] sm:$0xff]
    %vm61 = vcmask 523264
    %62 = vst.msk [vmem:[#allocation2 + $0x38] sm:$0xff] %vm61, %v59
    %63 = vst.msk [vmem:[#allocation2 + $0x50] sm:$0xff] %vm61, %v60
    %v64 = vld [vmem:[%s2] sm:$0x1]
    %v66 = vperm.slane %v64, 0
    %v68 = vld [vmem:[#allocation2 + $0x18] sm:$0xc0]
    %v69 = vld [vmem:[#allocation2 + $0x20] sm:$0xc0]
    %v70 = vld [vmem:[#allocation2 + $0x30] sm:$0xff]
    %v71 = vld [vmem:[#allocation2 + $0x38] sm:$0xff]
    %v72 = vld [vmem:[#allocation2 + $0x48] sm:$0xff]
    %v73 = vld [vmem:[#allocation2 + $0x50] sm:$0xff]
    %v74 = vld [vmem:[#allocation2 + $0x60] sm:$0x3]
    %v75 = vld [vmem:[#allocation2 + $0x68] sm:$0x3]
    %v76 = vperm.slane %v52, 0
    %78 = vrot.lane.b32.xlu0 %v76, 120
    %v79 = vpop.permute.xlu0 %78
    %v81 = vmul.f32 %v68, %v79
    %v82 = vmul.f32 %v69, %v79
    %v83 = vmul.f32 %v70, %v79
    %v84 = vmul.f32 %v71, %v79
    %v85 = vmul.f32 %v72, %v79
    %v86 = vmul.f32 %v73, %v79
    %vm93 = vcmask 1041408
    %v94 = vrot.slane %v81, 6
    %v95 = vrot.slane %v83, 6
    %v96 = vsel %vm93, %v94, %v95
    %v97 = vrot.slane %v82, 6
    %v98 = vrot.slane %v84, 6
    %v99 = vsel %vm93, %v97, %v98
    %v100 = vrot.slane %v85, 6
    %v101 = vsel %vm93, %v95, %v100
    %v102 = vrot.slane %v86, 6
    %v103 = vsel %vm93, %v98, %v102
    %104 = vrot.lane.b32.xlu0 %v96, 8
    %v105 = vpop.permute.xlu0 %104
    %106 = vrot.lane.b32.xlu0 %v99, 8
    %v107 = vpop.permute.xlu0 %106
    %108 = vrot.lane.b32.xlu0 %v101, 8
    %v109 = vpop.permute.xlu0 %108
    %110 = vrot.lane.b32.xlu0 %v103, 8
    %v111 = vpop.permute.xlu0 %110
    %vm112 = vcmask 64512
    %v113 = vsel %vm112, %v105, %v107
    %v114 = vsel %vm112, %v109, %v111
    %v117 = vadd.f32 %v66, %v113
    %v118 = vadd.f32 %v66, %v114
    %v119 = vperm.slane %v52, 5
    %121 = vrot.lane.b32.xlu0 %v119, 120
    %v122 = vpop.permute.xlu0 %121
    %v124 = vmul.f32 %v68, %v122
    %v125 = vmul.f32 %v69, %v122
    %v126 = vmul.f32 %v70, %v122
    %v127 = vmul.f32 %v71, %v122
    %v128 = vmul.f32 %v72, %v122
    %v129 = vmul.f32 %v73, %v122
    %vm136 = vcmask 1040384
    %v137 = vrot.slane %v124, 7
    %v138 = vrot.slane %v126, 7
    %v139 = vsel %vm136, %v137, %v138
    %v140 = vrot.slane %v125, 7
    %v141 = vrot.slane %v127, 7
    %v142 = vsel %vm136, %v140, %v141
    %v143 = vrot.slane %v128, 7
    %v144 = vsel %vm136, %v138, %v143
    %v145 = vrot.slane %v129, 7
    %v146 = vsel %vm136, %v141, %v145
    %147 = vrot.lane.b32.xlu0 %v139, 8
    %v148 = vpop.permute.xlu0 %147
    %149 = vrot.lane.b32.xlu0 %v142, 8
    %v150 = vpop.permute.xlu0 %149
    %151 = vrot.lane.b32.xlu0 %v144, 8
    %v152 = vpop.permute.xlu0 %151
    %153 = vrot.lane.b32.xlu0 %v146, 8
    %v154 = vpop.permute.xlu0 %153
    %v155 = vsel %vm112, %v148, %v150
    %v156 = vsel %vm112, %v152, %v154
    %v159 = vadd.f32 %v117, %v155
    %v160 = vadd.f32 %v118, %v156
    %v161 = vperm.slane %v53, 2
    %163 = vrot.lane.b32.xlu0 %v161, 120
    %v164 = vpop.permute.xlu0 %163
    %v166 = vmul.f32 %v70, %v164
    %v167 = vmul.f32 %v71, %v164
    %v168 = vmul.f32 %v72, %v164
    %v169 = vmul.f32 %v73, %v164
    %174 = vrot.lane.b32.xlu0 %v166, 8
    %v175 = vpop.permute.xlu0 %174
    %176 = vrot.lane.b32.xlu0 %v167, 8
    %v177 = vpop.permute.xlu0 %176
    %178 = vrot.lane.b32.xlu0 %v168, 8
    %v179 = vpop.permute.xlu0 %178
    %180 = vrot.lane.b32.xlu0 %v169, 8
    %v181 = vpop.permute.xlu0 %180
    %v182 = vsel %vm112, %v175, %v177
    %v183 = vsel %vm112, %v179, %v181
    %v186 = vadd.f32 %v159, %v182
    %v187 = vadd.f32 %v160, %v183
    %v188 = vperm.slane %v53, 7
    %190 = vrot.lane.b32.xlu0 %v188, 120
    %v191 = vpop.permute.xlu0 %190
    %v193 = vmul.f32 %v70, %v191
    %v194 = vmul.f32 %v71, %v191
    %v195 = vmul.f32 %v72, %v191
    %v196 = vmul.f32 %v73, %v191
    %v197 = vmul.f32 %v74, %v191
    %v198 = vmul.f32 %v75, %v191
    %vm205 = vcmask 1046528
    %v206 = vrot.slane %v193, 1
    %v207 = vrot.slane %v195, 1
    %v208 = vsel %vm205, %v206, %v207
    %v209 = vrot.slane %v194, 1
    %v210 = vrot.slane %v196, 1
    %v211 = vsel %vm205, %v209, %v210
    %v212 = vrot.slane %v197, 1
    %v213 = vsel %vm205, %v207, %v212
    %v214 = vrot.slane %v198, 1
    %v215 = vsel %vm205, %v210, %v214
    %216 = vrot.lane.b32.xlu0 %v208, 8
    %v217 = vpop.permute.xlu0 %216
    %218 = vrot.lane.b32.xlu0 %v211, 8
    %v219 = vpop.permute.xlu0 %218
    %220 = vrot.lane.b32.xlu0 %v213, 8
    %v221 = vpop.permute.xlu0 %220
    %222 = vrot.lane.b32.xlu0 %v215, 8
    %v223 = vpop.permute.xlu0 %222
    %v224 = vsel %vm112, %v217, %v219
    %v225 = vsel %vm112, %v221, %v223
    %v228 = vadd.f32 %v186, %v224
    %v229 = vadd.f32 %v187, %v225
    %v230 = vperm.slane %v54, 4
    %232 = vrot.lane.b32.xlu0 %v230, 120
    %v233 = vpop.permute.xlu0 %232
    %v235 = vmul.f32 %v70, %v233
    %v236 = vmul.f32 %v71, %v233
    %v237 = vmul.f32 %v72, %v233
    %v238 = vmul.f32 %v73, %v233
    %v239 = vmul.f32 %v74, %v233
    %v240 = vmul.f32 %v75, %v233
    %vm247 = vcmask 1045504
    %v248 = vrot.slane %v235, 2
    %v249 = vrot.slane %v237, 2
    %v250 = vsel %vm247, %v248, %v249
    %v251 = vrot.slane %v236, 2
    %v252 = vrot.slane %v238, 2
    %v253 = vsel %vm247, %v251, %v252
    %v254 = vrot.slane %v239, 2
    %v255 = vsel %vm247, %v249, %v254
    %v256 = vrot.slane %v240, 2
    %v257 = vsel %vm247, %v252, %v256
    %258 = vrot.lane.b32.xlu0 %v250, 8
    %v259 = vpop.permute.xlu0 %258
    %260 = vrot.lane.b32.xlu0 %v253, 8
    %v261 = vpop.permute.xlu0 %260
    %262 = vrot.lane.b32.xlu0 %v255, 8
    %v263 = vpop.permute.xlu0 %262
    %264 = vrot.lane.b32.xlu0 %v257, 8
    %v265 = vpop.permute.xlu0 %264
    %v266 = vsel %vm112, %v259, %v261
    %v267 = vsel %vm112, %v263, %v265
    %v270 = vadd.f32 %v228, %v266
    %v271 = vadd.f32 %v229, %v267
    %v272 = vperm.slane %v52, 1
    %274 = vrot.lane.b32.xlu0 %v272, 124
    %v275 = vpop.permute.xlu0 %274
    %v277 = vmul.f32 %v68, %v275
    %v278 = vmul.f32 %v69, %v275
    %v279 = vmul.f32 %v70, %v275
    %v280 = vmul.f32 %v71, %v275
    %v281 = vmul.f32 %v72, %v275
    %v282 = vmul.f32 %v73, %v275
    %v289 = vrot.slane %v277, 6
    %v290 = vrot.slane %v279, 6
    %v291 = vsel %vm93, %v289, %v290
    %v292 = vrot.slane %v278, 6
    %v293 = vrot.slane %v280, 6
    %v294 = vsel %vm93, %v292, %v293
    %v295 = vrot.slane %v281, 6
    %v296 = vsel %vm93, %v290, %v295
    %v297 = vrot.slane %v282, 6
    %v298 = vsel %vm93, %v293, %v297
    %299 = vrot.lane.b32.xlu0 %v291, 4
    %v300 = vpop.permute.xlu0 %299
    %301 = vrot.lane.b32.xlu0 %v294, 4
    %v302 = vpop.permute.xlu0 %301
    %303 = vrot.lane.b32.xlu0 %v296, 4
    %v304 = vpop.permute.xlu0 %303
    %305 = vrot.lane.b32.xlu0 %v298, 4
    %v306 = vpop.permute.xlu0 %305
    %vm307 = vcmask 31744
    %v308 = vsel %vm307, %v300, %v302
    %v309 = vsel %vm307, %v304, %v306
    %v312 = vadd.f32 %v270, %v308
    %v313 = vadd.f32 %v271, %v309
    %v314 = vperm.slane %v52, 6
    %316 = vrot.lane.b32.xlu0 %v314, 124
    %v317 = vpop.permute.xlu0 %316
    %v319 = vmul.f32 %v68, %v317
    %v320 = vmul.f32 %v69, %v317
    %v321 = vmul.f32 %v70, %v317
    %v322 = vmul.f32 %v71, %v317
    %v323 = vmul.f32 %v72, %v317
    %v324 = vmul.f32 %v73, %v317
    %v331 = vrot.slane %v319, 7
    %v332 = vrot.slane %v321, 7
    %v333 = vsel %vm136, %v331, %v332
    %v334 = vrot.slane %v320, 7
    %v335 = vrot.slane %v322, 7
    %v336 = vsel %vm136, %v334, %v335
    %v337 = vrot.slane %v323, 7
    %v338 = vsel %vm136, %v332, %v337
    %v339 = vrot.slane %v324, 7
    %v340 = vsel %vm136, %v335, %v339
    %341 = vrot.lane.b32.xlu0 %v333, 4
    %v342 = vpop.permute.xlu0 %341
    %343 = vrot.lane.b32.xlu0 %v336, 4
    %v344 = vpop.permute.xlu0 %343
    %345 = vrot.lane.b32.xlu0 %v338, 4
    %v346 = vpop.permute.xlu0 %345
    %347 = vrot.lane.b32.xlu0 %v340, 4
    %v348 = vpop.permute.xlu0 %347
    %v349 = vsel %vm307, %v342, %v344
    %v350 = vsel %vm307, %v346, %v348
    %v353 = vadd.f32 %v312, %v349
    %v354 = vadd.f32 %v313, %v350
    %v355 = vperm.slane %v53, 3
    %357 = vrot.lane.b32.xlu0 %v355, 124
    %v358 = vpop.permute.xlu0 %357
    %v360 = vmul.f32 %v70, %v358
    %v361 = vmul.f32 %v71, %v358
    %v362 = vmul.f32 %v72, %v358
    %v363 = vmul.f32 %v73, %v358
    %368 = vrot.lane.b32.xlu0 %v360, 4
    %v369 = vpop.permute.xlu0 %368
    %370 = vrot.lane.b32.xlu0 %v361, 4
    %v371 = vpop.permute.xlu0 %370
    %372 = vrot.lane.b32.xlu0 %v362, 4
    %v373 = vpop.permute.xlu0 %372
    %374 = vrot.lane.b32.xlu0 %v363, 4
    %v375 = vpop.permute.xlu0 %374
    %v376 = vsel %vm307, %v369, %v371
    %v377 = vsel %vm307, %v373, %v375
    %v380 = vadd.f32 %v353, %v376
    %v381 = vadd.f32 %v354, %v377
    %v382 = vperm.slane %v54, 0
    %384 = vrot.lane.b32.xlu0 %v382, 124
    %v385 = vpop.permute.xlu0 %384
    %v387 = vmul.f32 %v70, %v385
    %v388 = vmul.f32 %v71, %v385
    %v389 = vmul.f32 %v72, %v385
    %v390 = vmul.f32 %v73, %v385
    %v391 = vmul.f32 %v74, %v385
    %v392 = vmul.f32 %v75, %v385
    %v399 = vrot.slane %v387, 1
    %v400 = vrot.slane %v389, 1
    %v401 = vsel %vm205, %v399, %v400
    %v402 = vrot.slane %v388, 1
    %v403 = vrot.slane %v390, 1
    %v404 = vsel %vm205, %v402, %v403
    %v405 = vrot.slane %v391, 1
    %v406 = vsel %vm205, %v400, %v405
    %v407 = vrot.slane %v392, 1
    %v408 = vsel %vm205, %v403, %v407
    %409 = vrot.lane.b32.xlu0 %v401, 4
    %v410 = vpop.permute.xlu0 %409
    %411 = vrot.lane.b32.xlu0 %v404, 4
    %v412 = vpop.permute.xlu0 %411
    %413 = vrot.lane.b32.xlu0 %v406, 4
    %v414 = vpop.permute.xlu0 %413
    %415 = vrot.lane.b32.xlu0 %v408, 4
    %v416 = vpop.permute.xlu0 %415
    %v417 = vsel %vm307, %v410, %v412
    %v418 = vsel %vm307, %v414, %v416
    %v421 = vadd.f32 %v380, %v417
    %v422 = vadd.f32 %v381, %v418
    %v423 = vperm.slane %v54, 5
    %425 = vrot.lane.b32.xlu0 %v423, 124
    %v426 = vpop.permute.xlu0 %425
    %v428 = vmul.f32 %v70, %v426
    %v429 = vmul.f32 %v71, %v426
    %v430 = vmul.f32 %v72, %v426
    %v431 = vmul.f32 %v73, %v426
    %v432 = vmul.f32 %v74, %v426
    %v433 = vmul.f32 %v75, %v426
    %v440 = vrot.slane %v428, 2
    %v441 = vrot.slane %v430, 2
    %v442 = vsel %vm247, %v440, %v441
    %v443 = vrot.slane %v429, 2
    %v444 = vrot.slane %v431, 2
    %v445 = vsel %vm247, %v443, %v444
    %v446 = vrot.slane %v432, 2
    %v447 = vsel %vm247, %v441, %v446
    %v448 = vrot.slane %v433, 2
    %v449 = vsel %vm247, %v444, %v448
    %450 = vrot.lane.b32.xlu0 %v442, 4
    %v451 = vpop.permute.xlu0 %450
    %452 = vrot.lane.b32.xlu0 %v445, 4
    %v453 = vpop.permute.xlu0 %452
    %454 = vrot.lane.b32.xlu0 %v447, 4
    %v455 = vpop.permute.xlu0 %454
    %456 = vrot.lane.b32.xlu0 %v449, 4
    %v457 = vpop.permute.xlu0 %456
    %v458 = vsel %vm307, %v451, %v453
    %v459 = vsel %vm307, %v455, %v457
    %v462 = vadd.f32 %v421, %v458
    %v463 = vadd.f32 %v422, %v459
    %v464 = vperm.slane %v52, 2
    %v465 = vmul.f32 %v69, %v464
    %v466 = vmul.f32 %v71, %v464
    %v467 = vmul.f32 %v73, %v464
    %v471 = vrot.slane %v465, 6
    %v472 = vrot.slane %v466, 6
    %v473 = vsel %vm93, %v471, %v472
    %v474 = vrot.slane %v467, 6
    %v475 = vsel %vm93, %v472, %v474
    %v478 = vadd.f32 %v462, %v473
    %v479 = vadd.f32 %v463, %v475
    %v480 = vperm.slane %v52, 7
    %v481 = vmul.f32 %v69, %v480
    %v482 = vmul.f32 %v71, %v480
    %v483 = vmul.f32 %v73, %v480
    %v487 = vrot.slane %v481, 7
    %v488 = vrot.slane %v482, 7
    %v489 = vsel %vm136, %v487, %v488
    %v490 = vrot.slane %v483, 7
    %v491 = vsel %vm136, %v488, %v490
    %v494 = vadd.f32 %v478, %v489
    %v495 = vadd.f32 %v479, %v491
    %v496 = vperm.slane %v53, 4
    %v497 = vmul.f32 %v71, %v496
    %v498 = vmul.f32 %v73, %v496
    %v499 = vadd.f32 %v494, %v497
    %v500 = vadd.f32 %v495, %v498
    %v501 = vperm.slane %v54, 1
    %v502 = vmul.f32 %v71, %v501
    %v503 = vmul.f32 %v73, %v501
    %v504 = vmul.f32 %v75, %v501
    %v508 = vrot.slane %v502, 1
    %v509 = vrot.slane %v503, 1
    %v510 = vsel %vm205, %v508, %v509
    %v511 = vrot.slane %v504, 1
    %v512 = vsel %vm205, %v509, %v511
    %v515 = vadd.f32 %v499, %v510
    %v516 = vadd.f32 %v500, %v512
    %v517 = vperm.slane %v54, 6
    %v518 = vmul.f32 %v71, %v517
    %v519 = vmul.f32 %v73, %v517
    %v520 = vmul.f32 %v75, %v517
    %v524 = vrot.slane %v518, 2
    %v525 = vrot.slane %v519, 2
    %v526 = vsel %vm247, %v524, %v525
    %v527 = vrot.slane %v520, 2
    %v528 = vsel %vm247, %v525, %v527
    %v531 = vadd.f32 %v515, %v526
    %v532 = vadd.f32 %v516, %v528
    %v533 = vperm.slane %v52, 3
    %535 = vrot.lane.b32.xlu0 %v533, 4
    %v536 = vpop.permute.xlu0 %535
    %v538 = vmul.f32 %v69, %v536
    %v539 = vmul.f32 %v71, %v536
    %v540 = vmul.f32 %v73, %v536
    %v544 = vrot.slane %v538, 6
    %v545 = vrot.slane %v539, 6
    %v546 = vsel %vm93, %v544, %v545
    %v547 = vrot.slane %v540, 6
    %v548 = vsel %vm93, %v545, %v547
    %549 = vrot.lane.b32.xlu0 %v546, 124
    %v550 = vpop.permute.xlu0 %549
    %551 = vrot.lane.b32.xlu0 %v548, 124
    %v552 = vpop.permute.xlu0 %551
    %v555 = vadd.f32 %v531, %v550
    %v556 = vadd.f32 %v532, %v552
    %v557 = vperm.slane %v53, 0
    %559 = vrot.lane.b32.xlu0 %v557, 4
    %v560 = vpop.permute.xlu0 %559
    %v562 = vmul.f32 %v69, %v560
    %v563 = vmul.f32 %v71, %v560
    %v564 = vmul.f32 %v73, %v560
    %v568 = vrot.slane %v562, 7
    %v569 = vrot.slane %v563, 7
    %v570 = vsel %vm136, %v568, %v569
    %v571 = vrot.slane %v564, 7
    %v572 = vsel %vm136, %v569, %v571
    %573 = vrot.lane.b32.xlu0 %v570, 124
    %v574 = vpop.permute.xlu0 %573
    %575 = vrot.lane.b32.xlu0 %v572, 124
    %v576 = vpop.permute.xlu0 %575
    %v579 = vadd.f32 %v555, %v574
    %v580 = vadd.f32 %v556, %v576
    %v581 = vperm.slane %v53, 5
    %583 = vrot.lane.b32.xlu0 %v581, 4
    %v584 = vpop.permute.xlu0 %583
    %v586 = vmul.f32 %v71, %v584
    %v587 = vmul.f32 %v73, %v584
    %590 = vrot.lane.b32.xlu0 %v586, 124
    %v591 = vpop.permute.xlu0 %590
    %592 = vrot.lane.b32.xlu0 %v587, 124
    %v593 = vpop.permute.xlu0 %592
    %v596 = vadd.f32 %v579, %v591
    %v597 = vadd.f32 %v580, %v593
    %v598 = vperm.slane %v54, 2
    %600 = vrot.lane.b32.xlu0 %v598, 4
    %v601 = vpop.permute.xlu0 %600
    %v603 = vmul.f32 %v71, %v601
    %v604 = vmul.f32 %v73, %v601
    %v605 = vmul.f32 %v75, %v601
    %v609 = vrot.slane %v603, 1
    %v610 = vrot.slane %v604, 1
    %v611 = vsel %vm205, %v609, %v610
    %v612 = vrot.slane %v605, 1
    %v613 = vsel %vm205, %v610, %v612
    %614 = vrot.lane.b32.xlu0 %v611, 124
    %v615 = vpop.permute.xlu0 %614
    %616 = vrot.lane.b32.xlu0 %v613, 124
    %v617 = vpop.permute.xlu0 %616
    %v620 = vadd.f32 %v596, %v615
    %v621 = vadd.f32 %v597, %v617
    %v622 = vperm.slane %v54, 7
    %624 = vrot.lane.b32.xlu0 %v622, 4
    %v625 = vpop.permute.xlu0 %624
    %v627 = vmul.f32 %v71, %v625
    %v628 = vmul.f32 %v73, %v625
    %v629 = vmul.f32 %v75, %v625
    %v633 = vrot.slane %v627, 2
    %v634 = vrot.slane %v628, 2
    %v635 = vsel %vm247, %v633, %v634
    %v636 = vrot.slane %v629, 2
    %v637 = vsel %vm247, %v634, %v636
    %638 = vrot.lane.b32.xlu0 %v635, 124
    %v639 = vpop.permute.xlu0 %638
    %640 = vrot.lane.b32.xlu0 %v637, 124
    %v641 = vpop.permute.xlu0 %640
    %v644 = vadd.f32 %v620, %v639
    %v645 = vadd.f32 %v621, %v641
    %v646 = vperm.slane %v52, 4
    %648 = vrot.lane.b32.xlu0 %v646, 8
    %v649 = vpop.permute.xlu0 %648
    %v651 = vmul.f32 %v69, %v649
    %v652 = vmul.f32 %v71, %v649
    %v653 = vmul.f32 %v73, %v649
    %v657 = vrot.slane %v651, 6
    %v658 = vrot.slane %v652, 6
    %v659 = vsel %vm93, %v657, %v658
    %v660 = vrot.slane %v653, 6
    %v661 = vsel %vm93, %v658, %v660
    %662 = vrot.lane.b32.xlu0 %v659, 120
    %v663 = vpop.permute.xlu0 %662
    %664 = vrot.lane.b32.xlu0 %v661, 120
    %v665 = vpop.permute.xlu0 %664
    %v668 = vadd.f32 %v644, %v663
    %v669 = vadd.f32 %v645, %v665
    %v670 = vperm.slane %v53, 1
    %672 = vrot.lane.b32.xlu0 %v670, 8
    %v673 = vpop.permute.xlu0 %672
    %v675 = vmul.f32 %v69, %v673
    %v676 = vmul.f32 %v71, %v673
    %v677 = vmul.f32 %v73, %v673
    %v681 = vrot.slane %v675, 7
    %v682 = vrot.slane %v676, 7
    %v683 = vsel %vm136, %v681, %v682
    %v684 = vrot.slane %v677, 7
    %v685 = vsel %vm136, %v682, %v684
    %686 = vrot.lane.b32.xlu0 %v683, 120
    %v687 = vpop.permute.xlu0 %686
    %688 = vrot.lane.b32.xlu0 %v685, 120
    %v689 = vpop.permute.xlu0 %688
    %v692 = vadd.f32 %v668, %v687
    %v693 = vadd.f32 %v669, %v689
    %v694 = vperm.slane %v53, 6
    %696 = vrot.lane.b32.xlu0 %v694, 8
    %v697 = vpop.permute.xlu0 %696
    %v699 = vmul.f32 %v71, %v697
    %v700 = vmul.f32 %v73, %v697
    %703 = vrot.lane.b32.xlu0 %v699, 120
    %v704 = vpop.permute.xlu0 %703
    %705 = vrot.lane.b32.xlu0 %v700, 120
    %v706 = vpop.permute.xlu0 %705
    %v709 = vadd.f32 %v692, %v704
    %v710 = vadd.f32 %v693, %v706
    %v711 = vperm.slane %v54, 3
    %713 = vrot.lane.b32.xlu0 %v711, 8
    %v714 = vpop.permute.xlu0 %713
    %v716 = vmul.f32 %v71, %v714
    %v717 = vmul.f32 %v73, %v714
    %v718 = vmul.f32 %v75, %v714
    %v722 = vrot.slane %v716, 1
    %v723 = vrot.slane %v717, 1
    %v724 = vsel %vm205, %v722, %v723
    %v725 = vrot.slane %v718, 1
    %v726 = vsel %vm205, %v723, %v725
    %727 = vrot.lane.b32.xlu0 %v724, 120
    %v728 = vpop.permute.xlu0 %727
    %729 = vrot.lane.b32.xlu0 %v726, 120
    %v730 = vpop.permute.xlu0 %729
    %v733 = vadd.f32 %v709, %v728
    %v734 = vadd.f32 %v710, %v730
    %v735 = vperm.slane %v55, 0
    %737 = vrot.lane.b32.xlu0 %v735, 8
    %v738 = vpop.permute.xlu0 %737
    %v740 = vmul.f32 %v71, %v738
    %v741 = vmul.f32 %v73, %v738
    %v742 = vmul.f32 %v75, %v738
    %v746 = vrot.slane %v740, 2
    %v747 = vrot.slane %v741, 2
    %v748 = vsel %vm247, %v746, %v747
    %v749 = vrot.slane %v742, 2
    %v750 = vsel %vm247, %v747, %v749
    %751 = vrot.lane.b32.xlu0 %v748, 120
    %v752 = vpop.permute.xlu0 %751
    %753 = vrot.lane.b32.xlu0 %v750, 120
    %v754 = vpop.permute.xlu0 %753
    %v757 = vadd.f32 %v733, %v752
    %v758 = vadd.f32 %v734, %v754
    %759 = vst.msk [vmem:[#allocation2 + $0x38] sm:$0xff] %vm61, %v757
    %760 = vst.msk [vmem:[#allocation2 + $0x50] sm:$0xff] %vm61, %v758
    %v761 = vld [vmem:[#allocation2 + $0x30] sm:$0xff]
    %v762 = vld [vmem:[#allocation2 + $0x38] sm:$0xff]
    %v763 = vld [vmem:[#allocation2 + $0x48] sm:$0xff]
    %v764 = vld [vmem:[#allocation2 + $0x50] sm:$0xff]
    %v765 = vld [vmem:[%s3] sm:$0xff]
    %v766 = vld [vmem:[%s3 + $0x8] sm:$0xff]
    %v767 = vld [vmem:[%s3 + $0x10] sm:$0xff]
    %v768 = vld [vmem:[%s3 + $0x18] sm:$0xff]
    %v769 = vld [vmem:[%s3 + $0x20] sm:$0xff]
    %v770 = vld [vmem:[%s3 + $0x28] sm:$0xff]
    %v771 = vld [vmem:[%s3 + $0x30] sm:$0xff]
    %v772 = vld [vmem:[%s3 + $0x38] sm:$0xff]
    %v773 = vld [vmem:[%s3 + $0x40] sm:$0xff]
    %v774 = vld [vmem:[%s3 + $0x48] sm:$0xff]
    %v775 = vld [vmem:[%s3 + $0x50] sm:$0xff]
    %v776 = vld [vmem:[%s3 + $0x58] sm:$0xff]
    %v777 = vld [vmem:[%s3 + $0x60] sm:$0xff]
    %v778 = vld [vmem:[%s3 + $0x68] sm:$0xff]
    %v779 = vld [vmem:[%s3 + $0x70] sm:$0xff]
    %v780 = vld [vmem:[%s3 + $0x78] sm:$0xff]
    %v781 = vld [vmem:[%s3 + $0x80] sm:$0xff]
    %v782 = vld [vmem:[%s4] sm:$0x1]
    %v784 = vperm.slane %v782, 0
    %790 = vrot.lane.b32.xlu0 %v761, 36
    %v791 = vpop.permute.xlu0 %790
    %792 = vrot.lane.b32.xlu0 %v762, 36
    %v793 = vpop.permute.xlu0 %792
    %794 = vrot.lane.b32.xlu0 %v763, 36
    %v795 = vpop.permute.xlu0 %794
    %796 = vrot.lane.b32.xlu0 %v764, 36
    %v797 = vpop.permute.xlu0 %796
    %vm798 = vcmask 293888
    %v799 = vsel %vm798, %v791, %v793
    %v800 = vsel %vm798, %v795, %v797
    %v803 = vsel %vm112, %v793, 0
    %v805 = vsel %vm112, %v797, 0
    %807 = vmatpush.msra.mxu0 %v780
    %808 = vmatpush.msra.mxu0 %v779
    %809 = vmatpush.msra.mxu0 %v778
    %810 = vmatpush.msra.mxu0 %v777
    %811 = vmatpush.msra.mxu0 %v776
    %812 = vmatpush.msra.mxu0 %v775
    %813 = vmatpush.msra.mxu0 %v774
    %814 = vmatpush.msra.mxu0 %v773
    %815 = vmatpush.msra.mxu0 %v772
    %816 = vmatpush.msra.mxu0 %v771
    %817 = vmatpush.msra.mxu0 %v770
    %818 = vmatpush.msra.mxu0 %v769
    %819 = vmatpush.msra.mxu0 %v768
    %820 = vmatpush.msra.mxu0 %v767
    %821 = vmatpush.msra.mxu0 %v766
    %822 = vmatpush.msra.mxu0 %v765
    %823 = vmatmul.f32.gmra.mxu0 %v799
    %v824 = vpop.f32.mrf.mxu0
    %v825 = vadd.f32 %v784, %v824
    %826 = vmatmul.f32.gmra.mxu0 %v800
    %v827 = vpop.f32.mrf.mxu0
    %v828 = vadd.f32 %v784, %v827
    %829 = vdwg.mxu0
    %830 = vmatpush.msra.mxu0 0.0
    %831 = vmatpush.msra.mxu0 0.0
    %832 = vmatpush.msra.mxu0 0.0
    %833 = vmatpush.msra.mxu0 0.0
    %834 = vmatpush.msra.mxu0 0.0
    %835 = vmatpush.msra.mxu0 0.0
    %836 = vmatpush.msra.mxu0 0.0
    %837 = vmatpush.msra.mxu0 0.0
    %838 = vmatpush.msra.mxu0 0.0
    %839 = vmatpush.msra.mxu0 0.0
    %840 = vmatpush.msra.mxu0 0.0
    %841 = vmatpush.msra.mxu0 0.0
    %842 = vmatpush.msra.mxu0 0.0
    %843 = vmatpush.msra.mxu0 0.0
    %844 = vmatpush.msra.mxu0 0.0
    %845 = vmatpush.msra.mxu0 %v781
    %846 = vmatmul.f32.gmra.mxu0 %v803
    %v847 = vpop.f32.mrf.mxu0
    %v848 = vadd.f32 %v825, %v847
    %849 = vmatmul.f32.gmra.mxu0 %v805
    %v850 = vpop.f32.mrf.mxu0
    %v851 = vadd.f32 %v828, %v850
    %852 = vdwg.mxu0
    %853 = vst.msk [vmem:[#allocation2 + $0x38] sm:$0xff] %vm61, %v848
    %854 = vst.msk [vmem:[#allocation2 + $0x50] sm:$0xff] %vm61, %v851
    %v855 = vld [vmem:[%s6] sm:$0x1]
    %v857 = vperm.slane %v855, 0
    %v859 = vld [vmem:[#allocation2 + $0x8] sm:$0x80]
    %v860 = vld [vmem:[#allocation2 + $0x20] sm:$0xff]
    %v861 = vld [vmem:[#allocation2 + $0x38] sm:$0x7f]
    %v862 = vperm.slane %v56, 0
    %v863 = vmul.f32 %v859, %v862
    %v864 = vmul.f32 %v860, %v862
    %v865 = vmul.f32 %v861, %v862
    %v866 = vadd.f32 %v857, %v863
    %v867 = vadd.f32 %v857, %v864
    %v868 = vadd.f32 %v857, %v865
    %v869 = vld [vmem:[#allocation2 + $0x38] sm:$0xff]
    %v870 = vperm.slane %v56, 1
    %v871 = vmul.f32 %v860, %v870
    %v872 = vmul.f32 %v869, %v870
    %v875 = vrot.slane %v871, 1
    %v876 = vrot.slane %v872, 1
    %v877 = vsel %vm205, %v875, %v876
    %v881 = vadd.f32 %v866, %v875
    %v882 = vadd.f32 %v867, %v877
    %v883 = vadd.f32 %v868, %v876
    %v884 = vld [vmem:[#allocation2 + $0x20] sm:$0xfe]
    %v885 = vld [vmem:[#allocation2 + $0x50] sm:$0x1]
    %v886 = vperm.slane %v56, 2
    %v887 = vmul.f32 %v884, %v886
    %v888 = vmul.f32 %v869, %v886
    %v889 = vmul.f32 %v885, %v886
    %v893 = vrot.slane %v887, 2
    %v894 = vrot.slane %v888, 2
    %v895 = vsel %vm247, %v893, %v894
    %v896 = vrot.slane %v889, 2
    %v897 = vsel %vm247, %v894, %v896
    %v901 = vadd.f32 %v881, %v893
    %v902 = vadd.f32 %v882, %v895
    %v903 = vadd.f32 %v883, %v897
    %v904 = vld [vmem:[#allocation2 + $0x20] sm:$0xfc]
    %v905 = vld [vmem:[#allocation2 + $0x50] sm:$0x3]
    %v906 = vperm.slane %v56, 3
    %v907 = vmul.f32 %v904, %v906
    %v908 = vmul.f32 %v869, %v906
    %v909 = vmul.f32 %v905, %v906
    %vm913 = vcmask 1044480
    %v914 = vrot.slane %v907, 3
    %v915 = vrot.slane %v908, 3
    %v916 = vsel %vm913, %v914, %v915
    %v917 = vrot.slane %v909, 3
    %v918 = vsel %vm913, %v915, %v917
    %v922 = vadd.f32 %v901, %v914
    %v923 = vadd.f32 %v902, %v916
    %v924 = vadd.f32 %v903, %v918
    %v925 = vld [vmem:[#allocation2 + $0x20] sm:$0xf8]
    %v926 = vld [vmem:[#allocation2 + $0x50] sm:$0x7]
    %v927 = vperm.slane %v56, 4
    %v928 = vmul.f32 %v925, %v927
    %v929 = vmul.f32 %v869, %v927
    %v930 = vmul.f32 %v926, %v927
    %vm934 = vcmask 1043456
    %v935 = vrot.slane %v928, 4
    %v936 = vrot.slane %v929, 4
    %v937 = vsel %vm934, %v935, %v936
    %v938 = vrot.slane %v930, 4
    %v939 = vsel %vm934, %v936, %v938
    %v943 = vadd.f32 %v922, %v935
    %v944 = vadd.f32 %v923, %v937
    %v945 = vadd.f32 %v924, %v939
    %v946 = vld [vmem:[#allocation2 + $0x20] sm:$0xf0]
    %v947 = vld [vmem:[#allocation2 + $0x50] sm:$0xf]
    %v948 = vperm.slane %v56, 5
    %v949 = vmul.f32 %v946, %v948
    %v950 = vmul.f32 %v869, %v948
    %v951 = vmul.f32 %v947, %v948
    %vm955 = vcmask 1042432
    %v956 = vrot.slane %v949, 5
    %v957 = vrot.slane %v950, 5
    %v958 = vsel %vm955, %v956, %v957
    %v959 = vrot.slane %v951, 5
    %v960 = vsel %vm955, %v957, %v959
    %v964 = vadd.f32 %v943, %v956
    %v965 = vadd.f32 %v944, %v958
    %v966 = vadd.f32 %v945, %v960
    %v967 = vld [vmem:[#allocation2 + $0x20] sm:$0xe0]
    %v968 = vld [vmem:[#allocation2 + $0x50] sm:$0x1f]
    %v969 = vperm.slane %v56, 6
    %v970 = vmul.f32 %v967, %v969
    %v971 = vmul.f32 %v869, %v969
    %v972 = vmul.f32 %v968, %v969
    %v976 = vrot.slane %v970, 6
    %v977 = vrot.slane %v971, 6
    %v978 = vsel %vm93, %v976, %v977
    %v979 = vrot.slane %v972, 6
    %v980 = vsel %vm93, %v977, %v979
    %v984 = vadd.f32 %v964, %v976
    %v985 = vadd.f32 %v965, %v978
    %v986 = vadd.f32 %v966, %v980
    %v987 = vld [vmem:[#allocation2 + $0x20] sm:$0xc0]
    %v988 = vld [vmem:[#allocation2 + $0x50] sm:$0x3f]
    %v989 = vperm.slane %v56, 7
    %v990 = vmul.f32 %v987, %v989
    %v991 = vmul.f32 %v869, %v989
    %v992 = vmul.f32 %v988, %v989
    %v996 = vrot.slane %v990, 7
    %v997 = vrot.slane %v991, 7
    %v998 = vsel %vm136, %v996, %v997
    %v999 = vrot.slane %v992, 7
    %v1000 = vsel %vm136, %v997, %v999
    %v1004 = vadd.f32 %v984, %v996
    %v1005 = vadd.f32 %v985, %v998
    %v1006 = vadd.f32 %v986, %v1000
    %v1007 = vld [vmem:[#allocation2 + $0x20] sm:$0x80]
    %v1008 = vld [vmem:[#allocation2 + $0x50] sm:$0x7f]
    %v1009 = vperm.slane %v57, 0
    %v1010 = vmul.f32 %v1007, %v1009
    %v1011 = vmul.f32 %v869, %v1009
    %v1012 = vmul.f32 %v1008, %v1009
    %v1013 = vadd.f32 %v1004, %v1010
    %v1014 = vadd.f32 %v1005, %v1011
    %v1015 = vadd.f32 %v1006, %v1012
    %v1016 = vld [vmem:[#allocation2 + $0x50] sm:$0xff]
    %v1017 = vperm.slane %v57, 1
    %v1018 = vmul.f32 %v869, %v1017
    %v1019 = vmul.f32 %v1016, %v1017
    %v1022 = vrot.slane %v1018, 1
    %v1023 = vrot.slane %v1019, 1
    %v1024 = vsel %vm205, %v1022, %v1023
    %v1028 = vadd.f32 %v1013, %v1022
    %v1029 = vadd.f32 %v1014, %v1024
    %v1030 = vadd.f32 %v1015, %v1023
    %v1031 = vld [vmem:[#allocation2 + $0x38] sm:$0xfe]
    %v1032 = vld [vmem:[#allocation2 + $0x68] sm:$0x1]
    %v1033 = vperm.slane %v57, 2
    %v1034 = vmul.f32 %v1031, %v1033
    %v1035 = vmul.f32 %v1016, %v1033
    %v1036 = vmul.f32 %v1032, %v1033
    %v1040 = vrot.slane %v1034, 2
    %v1041 = vrot.slane %v1035, 2
    %v1042 = vsel %vm247, %v1040, %v1041
    %v1043 = vrot.slane %v1036, 2
    %v1044 = vsel %vm247, %v1041, %v1043
    %v1048 = vadd.f32 %v1028, %v1040
    %v1049 = vadd.f32 %v1029, %v1042
    %v1050 = vadd.f32 %v1030, %v1044
    %v1051 = vld [vmem:[#allocation2 + $0x38] sm:$0xfc]
    %v1052 = vld [vmem:[#allocation2 + $0x68] sm:$0x3]
    %v1053 = vperm.slane %v57, 3
    %v1054 = vmul.f32 %v1051, %v1053
    %v1055 = vmul.f32 %v1016, %v1053
    %v1056 = vmul.f32 %v1052, %v1053
    %v1060 = vrot.slane %v1054, 3
    %v1061 = vrot.slane %v1055, 3
    %v1062 = vsel %vm913, %v1060, %v1061
    %v1063 = vrot.slane %v1056, 3
    %v1064 = vsel %vm913, %v1061, %v1063
    %v1068 = vadd.f32 %v1048, %v1060
    %v1069 = vadd.f32 %v1049, %v1062
    %v1070 = vadd.f32 %v1050, %v1064
    %v1071 = vld [vmem:[#allocation2 + $0x38] sm:$0xf8]
    %v1072 = vld [vmem:[#allocation2 + $0x68] sm:$0x7]
    %v1073 = vperm.slane %v57, 4
    %v1074 = vmul.f32 %v1071, %v1073
    %v1075 = vmul.f32 %v1016, %v1073
    %v1076 = vmul.f32 %v1072, %v1073
    %v1080 = vrot.slane %v1074, 4
    %v1081 = vrot.slane %v1075, 4
    %v1082 = vsel %vm934, %v1080, %v1081
    %v1083 = vrot.slane %v1076, 4
    %v1084 = vsel %vm934, %v1081, %v1083
    %v1088 = vadd.f32 %v1068, %v1080
    %v1089 = vadd.f32 %v1069, %v1082
    %v1090 = vadd.f32 %v1070, %v1084
    %v1091 = vld [vmem:[#allocation2 + $0x38] sm:$0xf0]
    %v1092 = vld [vmem:[#allocation2 + $0x68] sm:$0xf]
    %v1093 = vperm.slane %v57, 5
    %v1094 = vmul.f32 %v1091, %v1093
    %v1095 = vmul.f32 %v1016, %v1093
    %v1096 = vmul.f32 %v1092, %v1093
    %v1100 = vrot.slane %v1094, 5
    %v1101 = vrot.slane %v1095, 5
    %v1102 = vsel %vm955, %v1100, %v1101
    %v1103 = vrot.slane %v1096, 5
    %v1104 = vsel %vm955, %v1101, %v1103
    %v1108 = vadd.f32 %v1088, %v1100
    %v1109 = vadd.f32 %v1089, %v1102
    %v1110 = vadd.f32 %v1090, %v1104
    %v1111 = vld [vmem:[#allocation2 + $0x38] sm:$0xe0]
    %v1112 = vld [vmem:[#allocation2 + $0x68] sm:$0x1f]
    %v1113 = vperm.slane %v57, 6
    %v1114 = vmul.f32 %v1111, %v1113
    %v1115 = vmul.f32 %v1016, %v1113
    %v1116 = vmul.f32 %v1112, %v1113
    %v1120 = vrot.slane %v1114, 6
    %v1121 = vrot.slane %v1115, 6
    %v1122 = vsel %vm93, %v1120, %v1121
    %v1123 = vrot.slane %v1116, 6
    %v1124 = vsel %vm93, %v1121, %v1123
    %v1128 = vadd.f32 %v1108, %v1120
    %v1129 = vadd.f32 %v1109, %v1122
    %v1130 = vadd.f32 %v1110, %v1124
    %v1131 = vld [vmem:[#allocation2 + $0x38] sm:$0xc0]
    %v1132 = vld [vmem:[#allocation2 + $0x68] sm:$0x3f]
    %v1133 = vperm.slane %v57, 7
    %v1134 = vmul.f32 %v1131, %v1133
    %v1135 = vmul.f32 %v1016, %v1133
    %v1136 = vmul.f32 %v1132, %v1133
    %v1140 = vrot.slane %v1134, 7
    %v1141 = vrot.slane %v1135, 7
    %v1142 = vsel %vm136, %v1140, %v1141
    %v1143 = vrot.slane %v1136, 7
    %v1144 = vsel %vm136, %v1141, %v1143
    %v1148 = vadd.f32 %v1128, %v1140
    %v1149 = vadd.f32 %v1129, %v1142
    %v1150 = vadd.f32 %v1130, %v1144
    %v1151 = vld [vmem:[#allocation2 + $0x38] sm:$0x80]
    %v1152 = vld [vmem:[#allocation2 + $0x68] sm:$0x7f]
    %v1153 = vperm.slane %v58, 0
    %v1154 = vmul.f32 %v1151, %v1153
    %v1155 = vmul.f32 %v1016, %v1153
    %v1156 = vmul.f32 %v1152, %v1153
    %v1157 = vadd.f32 %v1148, %v1154
    %v1158 = vadd.f32 %v1149, %v1155
    %v1159 = vadd.f32 %v1150, %v1156
    %v1160 = vld [vmem:[#allocation2 + $0x68] sm:$0xff]
    %v1161 = vperm.slane %v58, 1
    %v1162 = vmul.f32 %v1016, %v1161
    %v1163 = vmul.f32 %v1160, %v1161
    %v1166 = vrot.slane %v1162, 1
    %v1167 = vrot.slane %v1163, 1
    %v1168 = vsel %vm205, %v1166, %v1167
    %v1172 = vadd.f32 %v1157, %v1166
    %v1173 = vadd.f32 %v1158, %v1168
    %v1174 = vadd.f32 %v1159, %v1167
    %v1175 = vld [vmem:[#allocation2 + $0x50] sm:$0xfe]
    %v1176 = vld [vmem:[#allocation2 + $0x80] sm:$0x1]
    %v1177 = vperm.slane %v58, 2
    %v1178 = vmul.f32 %v1175, %v1177
    %v1179 = vmul.f32 %v1160, %v1177
    %v1180 = vmul.f32 %v1176, %v1177
    %v1184 = vrot.slane %v1178, 2
    %v1185 = vrot.slane %v1179, 2
    %v1186 = vsel %vm247, %v1184, %v1185
    %v1187 = vrot.slane %v1180, 2
    %v1188 = vsel %vm247, %v1185, %v1187
    %v1192 = vadd.f32 %v1172, %v1184
    %v1193 = vadd.f32 %v1173, %v1186
    %v1194 = vadd.f32 %v1174, %v1188
    %v1195 = vld [vmem:[%s7] sm:$0xff]
    %v1196 = vld [vmem:[%s7 + $0x8] sm:$0xff]
    %v1197 = vld [vmem:[%s7 + $0x10] sm:$0xff]
    %v1198 = vld [vmem:[%s7 + $0x18] sm:$0xff]
    %v1199 = vld [vmem:[%s7 + $0x20] sm:$0xff]
    %v1200 = vld [vmem:[%s7 + $0x28] sm:$0xff]
    %v1201 = vld [vmem:[%s7 + $0x30] sm:$0xff]
    %v1202 = vld [vmem:[%s7 + $0x38] sm:$0xff]
    %v1203 = vld [vmem:[%s8] sm:$0x1]
    %v1205 = vperm.slane %v1203, 0
    %v1210 = vrot.slane %v1192, 7
    %v1211 = vrot.slane %v1193, 7
    %v1212 = vsel %vm136, %v1210, %v1211
    %v1213 = vrot.slane %v1194, 7
    %v1214 = vsel %vm136, %v1211, %v1213
    %v1215 = vsel %vm61, %v1212, 0
    %v1217 = vsel %vm61, %v1214, 0
    %1219 = vmatpush.msra.mxu0 0.0
    %1220 = vmatpush.msra.mxu0 0.0
    %1221 = vmatpush.msra.mxu0 0.0
    %1222 = vmatpush.msra.mxu0 0.0
    %1223 = vmatpush.msra.mxu0 0.0
    %1224 = vmatpush.msra.mxu0 0.0
    %1225 = vmatpush.msra.mxu0 0.0
    %1226 = vmatpush.msra.mxu0 0.0
    %1227 = vmatpush.msra.mxu0 %v1202
    %1228 = vmatpush.msra.mxu0 %v1201
    %1229 = vmatpush.msra.mxu0 %v1200
    %1230 = vmatpush.msra.mxu0 %v1199
    %1231 = vmatpush.msra.mxu0 %v1198
    %1232 = vmatpush.msra.mxu0 %v1197
    %1233 = vmatpush.msra.mxu0 %v1196
    %1234 = vmatpush.msra.mxu0 %v1195
    %1235 = vmatmul.f32.gmra.mxu0 %v1215
    %v1236 = vpop.f32.mrf.mxu0
    %v1237 = vadd.f32 %v1205, %v1236
    %1238 = vmatmul.f32.gmra.mxu0 %v1217
    %v1239 = vpop.f32.mrf.mxu0
    %v1240 = vadd.f32 %v1205, %v1239
    %1241 = vdwg.mxu0
    %v1242 = vmul.f32 %v59, %v1237
    %v1243 = vmul.f32 %v60, %v1240
    %1244 = vst.msk [vmem:[#allocation3] sm:$0xff] %vm61, %v1242
    %1245 = vst.msk [vmem:[#allocation3 + $0x8] sm:$0xff] %vm61, %v1243
    %s1246 = scalar_lea.vmem %s0, 16
    %v1247 = vld [vmem:[%s1246] sm:$0xff]
    %v1248 = vld [vmem:[%s1246 + $0x8] sm:$0xff]
    %1249 = vst.msk [vmem:[#allocation2 + $0x38] sm:$0xff] %vm61, %v1247
    %1250 = vst.msk [vmem:[#allocation2 + $0x50] sm:$0xff] %vm61, %v1248
    %v1251 = vld [vmem:[%s2] sm:$0x1]
    %v1253 = vperm.slane %v1251, 0
    %v1255 = vld [vmem:[#allocation2 + $0x18] sm:$0xc0]
    %v1256 = vld [vmem:[#allocation2 + $0x20] sm:$0xc0]
    %v1257 = vld [vmem:[#allocation2 + $0x30] sm:$0xff]
    %v1258 = vld [vmem:[#allocation2 + $0x38] sm:$0xff]
    %v1259 = vld [vmem:[#allocation2 + $0x48] sm:$0xff]
    %v1260 = vld [vmem:[#allocation2 + $0x50] sm:$0xff]
    %v1261 = vld [vmem:[#allocation2 + $0x60] sm:$0x3]
    %v1262 = vld [vmem:[#allocation2 + $0x68] sm:$0x3]
    %v1263 = vmul.f32 %v1255, %v79
    %v1264 = vmul.f32 %v1256, %v79
    %v1265 = vmul.f32 %v1257, %v79
    %v1266 = vmul.f32 %v1258, %v79
    %v1267 = vmul.f32 %v1259, %v79
    %v1268 = vmul.f32 %v1260, %v79
    %v1275 = vrot.slane %v1263, 6
    %v1276 = vrot.slane %v1265, 6
    %v1277 = vsel %vm93, %v1275, %v1276
    %v1278 = vrot.slane %v1264, 6
    %v1279 = vrot.slane %v1266, 6
    %v1280 = vsel %vm93, %v1278, %v1279
    %v1281 = vrot.slane %v1267, 6
    %v1282 = vsel %vm93, %v1276, %v1281
    %v1283 = vrot.slane %v1268, 6
    %v1284 = vsel %vm93, %v1279, %v1283
    %1285 = vrot.lane.b32.xlu0 %v1277, 8
    %v1286 = vpop.permute.xlu0 %1285
    %1287 = vrot.lane.b32.xlu0 %v1280, 8
    %v1288 = vpop.permute.xlu0 %1287
    %1289 = vrot.lane.b32.xlu0 %v1282, 8
    %v1290 = vpop.permute.xlu0 %1289
    %1291 = vrot.lane.b32.xlu0 %v1284, 8
    %v1292 = vpop.permute.xlu0 %1291
    %v1293 = vsel %vm112, %v1286, %v1288
    %v1294 = vsel %vm112, %v1290, %v1292
    %v1297 = vadd.f32 %v1253, %v1293
    %v1298 = vadd.f32 %v1253, %v1294
    %v1299 = vmul.f32 %v1255, %v122
    %v1300 = vmul.f32 %v1256, %v122
    %v1301 = vmul.f32 %v1257, %v122
    %v1302 = vmul.f32 %v1258, %v122
    %v1303 = vmul.f32 %v1259, %v122
    %v1304 = vmul.f32 %v1260, %v122
    %v1311 = vrot.slane %v1299, 7
    %v1312 = vrot.slane %v1301, 7
    %v1313 = vsel %vm136, %v1311, %v1312
    %v1314 = vrot.slane %v1300, 7
    %v1315 = vrot.slane %v1302, 7
    %v1316 = vsel %vm136, %v1314, %v1315
    %v1317 = vrot.slane %v1303, 7
    %v1318 = vsel %vm136, %v1312, %v1317
    %v1319 = vrot.slane %v1304, 7
    %v1320 = vsel %vm136, %v1315, %v1319
    %1321 = vrot.lane.b32.xlu0 %v1313, 8
    %v1322 = vpop.permute.xlu0 %1321
    %1323 = vrot.lane.b32.xlu0 %v1316, 8
    %v1324 = vpop.permute.xlu0 %1323
    %1325 = vrot.lane.b32.xlu0 %v1318, 8
    %v1326 = vpop.permute.xlu0 %1325
    %1327 = vrot.lane.b32.xlu0 %v1320, 8
    %v1328 = vpop.permute.xlu0 %1327
    %v1329 = vsel %vm112, %v1322, %v1324
    %v1330 = vsel %vm112, %v1326, %v1328
    %v1333 = vadd.f32 %v1297, %v1329
    %v1334 = vadd.f32 %v1298, %v1330
    %v1335 = vmul.f32 %v1257, %v164
    %v1336 = vmul.f32 %v1258, %v164
    %v1337 = vmul.f32 %v1259, %v164
    %v1338 = vmul.f32 %v1260, %v164
    %1343 = vrot.lane.b32.xlu0 %v1335, 8
    %v1344 = vpop.permute.xlu0 %1343
    %1345 = vrot.lane.b32.xlu0 %v1336, 8
    %v1346 = vpop.permute.xlu0 %1345
    %1347 = vrot.lane.b32.xlu0 %v1337, 8
    %v1348 = vpop.permute.xlu0 %1347
    %1349 = vrot.lane.b32.xlu0 %v1338, 8
    %v1350 = vpop.permute.xlu0 %1349
    %v1351 = vsel %vm112, %v1344, %v1346
    %v1352 = vsel %vm112, %v1348, %v1350
    %v1355 = vadd.f32 %v1333, %v1351
    %v1356 = vadd.f32 %v1334, %v1352
    %v1357 = vmul.f32 %v1257, %v191
    %v1358 = vmul.f32 %v1258, %v191
    %v1359 = vmul.f32 %v1259, %v191
    %v1360 = vmul.f32 %v1260, %v191
    %v1361 = vmul.f32 %v1261, %v191
    %v1362 = vmul.f32 %v1262, %v191
    %v1369 = vrot.slane %v1357, 1
    %v1370 = vrot.slane %v1359, 1
    %v1371 = vsel %vm205, %v1369, %v1370
    %v1372 = vrot.slane %v1358, 1
    %v1373 = vrot.slane %v1360, 1
    %v1374 = vsel %vm205, %v1372, %v1373
    %v1375 = vrot.slane %v1361, 1
    %v1376 = vsel %vm205, %v1370, %v1375
    %v1377 = vrot.slane %v1362, 1
    %v1378 = vsel %vm205, %v1373, %v1377
    %1379 = vrot.lane.b32.xlu0 %v1371, 8
    %v1380 = vpop.permute.xlu0 %1379
    %1381 = vrot.lane.b32.xlu0 %v1374, 8
    %v1382 = vpop.permute.xlu0 %1381
    %1383 = vrot.lane.b32.xlu0 %v1376, 8
    %v1384 = vpop.permute.xlu0 %1383
    %1385 = vrot.lane.b32.xlu0 %v1378, 8
    %v1386 = vpop.permute.xlu0 %1385
    %v1387 = vsel %vm112, %v1380, %v1382
    %v1388 = vsel %vm112, %v1384, %v1386
    %v1391 = vadd.f32 %v1355, %v1387
    %v1392 = vadd.f32 %v1356, %v1388
    %v1393 = vmul.f32 %v1257, %v233
    %v1394 = vmul.f32 %v1258, %v233
    %v1395 = vmul.f32 %v1259, %v233
    %v1396 = vmul.f32 %v1260, %v233
    %v1397 = vmul.f32 %v1261, %v233
    %v1398 = vmul.f32 %v1262, %v233
    %v1405 = vrot.slane %v1393, 2
    %v1406 = vrot.slane %v1395, 2
    %v1407 = vsel %vm247, %v1405, %v1406
    %v1408 = vrot.slane %v1394, 2
    %v1409 = vrot.slane %v1396, 2
    %v1410 = vsel %vm247, %v1408, %v1409
    %v1411 = vrot.slane %v1397, 2
    %v1412 = vsel %vm247, %v1406, %v1411
    %v1413 = vrot.slane %v1398, 2
    %v1414 = vsel %vm247, %v1409, %v1413
    %1415 = vrot.lane.b32.xlu0 %v1407, 8
    %v1416 = vpop.permute.xlu0 %1415
    %1417 = vrot.lane.b32.xlu0 %v1410, 8
    %v1418 = vpop.permute.xlu0 %1417
    %1419 = vrot.lane.b32.xlu0 %v1412, 8
    %v1420 = vpop.permute.xlu0 %1419
    %1421 = vrot.lane.b32.xlu0 %v1414, 8
    %v1422 = vpop.permute.xlu0 %1421
    %v1423 = vsel %vm112, %v1416, %v1418
    %v1424 = vsel %vm112, %v1420, %v1422
    %v1427 = vadd.f32 %v1391, %v1423
    %v1428 = vadd.f32 %v1392, %v1424
    %v1429 = vmul.f32 %v1255, %v275
    %v1430 = vmul.f32 %v1256, %v275
    %v1431 = vmul.f32 %v1257, %v275
    %v1432 = vmul.f32 %v1258, %v275
    %v1433 = vmul.f32 %v1259, %v275
    %v1434 = vmul.f32 %v1260, %v275
    %v1441 = vrot.slane %v1429, 6
    %v1442 = vrot.slane %v1431, 6
    %v1443 = vsel %vm93, %v1441, %v1442
    %v1444 = vrot.slane %v1430, 6
    %v1445 = vrot.slane %v1432, 6
    %v1446 = vsel %vm93, %v1444, %v1445
    %v1447 = vrot.slane %v1433, 6
    %v1448 = vsel %vm93, %v1442, %v1447
    %v1449 = vrot.slane %v1434, 6
    %v1450 = vsel %vm93, %v1445, %v1449
    %1451 = vrot.lane.b32.xlu0 %v1443, 4
    %v1452 = vpop.permute.xlu0 %1451
    %1453 = vrot.lane.b32.xlu0 %v1446, 4
    %v1454 = vpop.permute.xlu0 %1453
    %1455 = vrot.lane.b32.xlu0 %v1448, 4
    %v1456 = vpop.permute.xlu0 %1455
    %1457 = vrot.lane.b32.xlu0 %v1450, 4
    %v1458 = vpop.permute.xlu0 %1457
    %v1459 = vsel %vm307, %v1452, %v1454
    %v1460 = vsel %vm307, %v1456, %v1458
    %v1463 = vadd.f32 %v1427, %v1459
    %v1464 = vadd.f32 %v1428, %v1460
    %v1465 = vmul.f32 %v1255, %v317
    %v1466 = vmul.f32 %v1256, %v317
    %v1467 = vmul.f32 %v1257, %v317
    %v1468 = vmul.f32 %v1258, %v317
    %v1469 = vmul.f32 %v1259, %v317
    %v1470 = vmul.f32 %v1260, %v317
    %v1477 = vrot.slane %v1465, 7
    %v1478 = vrot.slane %v1467, 7
    %v1479 = vsel %vm136, %v1477, %v1478
    %v1480 = vrot.slane %v1466, 7
    %v1481 = vrot.slane %v1468, 7
    %v1482 = vsel %vm136, %v1480, %v1481
    %v1483 = vrot.slane %v1469, 7
    %v1484 = vsel %vm136, %v1478, %v1483
    %v1485 = vrot.slane %v1470, 7
    %v1486 = vsel %vm136, %v1481, %v1485
    %1487 = vrot.lane.b32.xlu0 %v1479, 4
    %v1488 = vpop.permute.xlu0 %1487
    %1489 = vrot.lane.b32.xlu0 %v1482, 4
    %v1490 = vpop.permute.xlu0 %1489
    %1491 = vrot.lane.b32.xlu0 %v1484, 4
    %v1492 = vpop.permute.xlu0 %1491
    %1493 = vrot.lane.b32.xlu0 %v1486, 4
    %v1494 = vpop.permute.xlu0 %1493
    %v1495 = vsel %vm307, %v1488, %v1490
    %v1496 = vsel %vm307, %v1492, %v1494
    %v1499 = vadd.f32 %v1463, %v1495
    %v1500 = vadd.f32 %v1464, %v1496
    %v1501 = vmul.f32 %v1257, %v358
    %v1502 = vmul.f32 %v1258, %v358
    %v1503 = vmul.f32 %v1259, %v358
    %v1504 = vmul.f32 %v1260, %v358
    %1509 = vrot.lane.b32.xlu0 %v1501, 4
    %v1510 = vpop.permute.xlu0 %1509
    %1511 = vrot.lane.b32.xlu0 %v1502, 4
    %v1512 = vpop.permute.xlu0 %1511
    %1513 = vrot.lane.b32.xlu0 %v1503, 4
    %v1514 = vpop.permute.xlu0 %1513
    %1515 = vrot.lane.b32.xlu0 %v1504, 4
    %v1516 = vpop.permute.xlu0 %1515
    %v1517 = vsel %vm307, %v1510, %v1512
    %v1518 = vsel %vm307, %v1514, %v1516
    %v1521 = vadd.f32 %v1499, %v1517
    %v1522 = vadd.f32 %v1500, %v1518
    %v1523 = vmul.f32 %v1257, %v385
    %v1524 = vmul.f32 %v1258, %v385
    %v1525 = vmul.f32 %v1259, %v385
    %v1526 = vmul.f32 %v1260, %v385
    %v1527 = vmul.f32 %v1261, %v385
    %v1528 = vmul.f32 %v1262, %v385
    %v1535 = vrot.slane %v1523, 1
    %v1536 = vrot.slane %v1525, 1
    %v1537 = vsel %vm205, %v1535, %v1536
    %v1538 = vrot.slane %v1524, 1
    %v1539 = vrot.slane %v1526, 1
    %v1540 = vsel %vm205, %v1538, %v1539
    %v1541 = vrot.slane %v1527, 1
    %v1542 = vsel %vm205, %v1536, %v1541
    %v1543 = vrot.slane %v1528, 1
    %v1544 = vsel %vm205, %v1539, %v1543
    %1545 = vrot.lane.b32.xlu0 %v1537, 4
    %v1546 = vpop.permute.xlu0 %1545
    %1547 = vrot.lane.b32.xlu0 %v1540, 4
    %v1548 = vpop.permute.xlu0 %1547
    %1549 = vrot.lane.b32.xlu0 %v1542, 4
    %v1550 = vpop.permute.xlu0 %1549
    %1551 = vrot.lane.b32.xlu0 %v1544, 4
    %v1552 = vpop.permute.xlu0 %1551
    %v1553 = vsel %vm307, %v1546, %v1548
    %v1554 = vsel %vm307, %v1550, %v1552
    %v1557 = vadd.f32 %v1521, %v1553
    %v1558 = vadd.f32 %v1522, %v1554
    %v1559 = vmul.f32 %v1257, %v426
    %v1560 = vmul.f32 %v1258, %v426
    %v1561 = vmul.f32 %v1259, %v426
    %v1562 = vmul.f32 %v1260, %v426
    %v1563 = vmul.f32 %v1261, %v426
    %v1564 = vmul.f32 %v1262, %v426
    %v1571 = vrot.slane %v1559, 2
    %v1572 = vrot.slane %v1561, 2
    %v1573 = vsel %vm247, %v1571, %v1572
    %v1574 = vrot.slane %v1560, 2
    %v1575 = vrot.slane %v1562, 2
    %v1576 = vsel %vm247, %v1574, %v1575
    %v1577 = vrot.slane %v1563, 2
    %v1578 = vsel %vm247, %v1572, %v1577
    %v1579 = vrot.slane %v1564, 2
    %v1580 = vsel %vm247, %v1575, %v1579
    %1581 = vrot.lane.b32.xlu0 %v1573, 4
    %v1582 = vpop.permute.xlu0 %1581
    %1583 = vrot.lane.b32.xlu0 %v1576, 4
    %v1584 = vpop.permute.xlu0 %1583
    %1585 = vrot.lane.b32.xlu0 %v1578, 4
    %v1586 = vpop.permute.xlu0 %1585
    %1587 = vrot.lane.b32.xlu0 %v1580, 4
    %v1588 = vpop.permute.xlu0 %1587
    %v1589 = vsel %vm307, %v1582, %v1584
    %v1590 = vsel %vm307, %v1586, %v1588
    %v1593 = vadd.f32 %v1557, %v1589
    %v1594 = vadd.f32 %v1558, %v1590
    %v1595 = vmul.f32 %v1256, %v464
    %v1596 = vmul.f32 %v1258, %v464
    %v1597 = vmul.f32 %v1260, %v464
    %v1601 = vrot.slane %v1595, 6
    %v1602 = vrot.slane %v1596, 6
    %v1603 = vsel %vm93, %v1601, %v1602
    %v1604 = vrot.slane %v1597, 6
    %v1605 = vsel %vm93, %v1602, %v1604
    %v1608 = vadd.f32 %v1593, %v1603
    %v1609 = vadd.f32 %v1594, %v1605
    %v1610 = vmul.f32 %v1256, %v480
    %v1611 = vmul.f32 %v1258, %v480
    %v1612 = vmul.f32 %v1260, %v480
    %v1616 = vrot.slane %v1610, 7
    %v1617 = vrot.slane %v1611, 7
    %v1618 = vsel %vm136, %v1616, %v1617
    %v1619 = vrot.slane %v1612, 7
    %v1620 = vsel %vm136, %v1617, %v1619
    %v1623 = vadd.f32 %v1608, %v1618
    %v1624 = vadd.f32 %v1609, %v1620
    %v1625 = vmul.f32 %v1258, %v496
    %v1626 = vmul.f32 %v1260, %v496
    %v1627 = vadd.f32 %v1623, %v1625
    %v1628 = vadd.f32 %v1624, %v1626
    %v1629 = vmul.f32 %v1258, %v501
    %v1630 = vmul.f32 %v1260, %v501
    %v1631 = vmul.f32 %v1262, %v501
    %v1635 = vrot.slane %v1629, 1
    %v1636 = vrot.slane %v1630, 1
    %v1637 = vsel %vm205, %v1635, %v1636
    %v1638 = vrot.slane %v1631, 1
    %v1639 = vsel %vm205, %v1636, %v1638
    %v1642 = vadd.f32 %v1627, %v1637
    %v1643 = vadd.f32 %v1628, %v1639
    %v1644 = vmul.f32 %v1258, %v517
    %v1645 = vmul.f32 %v1260, %v517
    %v1646 = vmul.f32 %v1262, %v517
    %v1650 = vrot.slane %v1644, 2
    %v1651 = vrot.slane %v1645, 2
    %v1652 = vsel %vm247, %v1650, %v1651
    %v1653 = vrot.slane %v1646, 2
    %v1654 = vsel %vm247, %v1651, %v1653
    %v1657 = vadd.f32 %v1642, %v1652
    %v1658 = vadd.f32 %v1643, %v1654
    %v1659 = vmul.f32 %v1256, %v536
    %v1660 = vmul.f32 %v1258, %v536
    %v1661 = vmul.f32 %v1260, %v536
    %v1665 = vrot.slane %v1659, 6
    %v1666 = vrot.slane %v1660, 6
    %v1667 = vsel %vm93, %v1665, %v1666
    %v1668 = vrot.slane %v1661, 6
    %v1669 = vsel %vm93, %v1666, %v1668
    %1670 = vrot.lane.b32.xlu0 %v1667, 124
    %v1671 = vpop.permute.xlu0 %1670
    %1672 = vrot.lane.b32.xlu0 %v1669, 124
    %v1673 = vpop.permute.xlu0 %1672
    %v1676 = vadd.f32 %v1657, %v1671
    %v1677 = vadd.f32 %v1658, %v1673
    %v1678 = vmul.f32 %v1256, %v560
    %v1679 = vmul.f32 %v1258, %v560
    %v1680 = vmul.f32 %v1260, %v560
    %v1684 = vrot.slane %v1678, 7
    %v1685 = vrot.slane %v1679, 7
    %v1686 = vsel %vm136, %v1684, %v1685
    %v1687 = vrot.slane %v1680, 7
    %v1688 = vsel %vm136, %v1685, %v1687
    %1689 = vrot.lane.b32.xlu0 %v1686, 124
    %v1690 = vpop.permute.xlu0 %1689
    %1691 = vrot.lane.b32.xlu0 %v1688, 124
    %v1692 = vpop.permute.xlu0 %1691
    %v1695 = vadd.f32 %v1676, %v1690
    %v1696 = vadd.f32 %v1677, %v1692
    %v1697 = vmul.f32 %v1258, %v584
    %v1698 = vmul.f32 %v1260, %v584
    %1701 = vrot.lane.b32.xlu0 %v1697, 124
    %v1702 = vpop.permute.xlu0 %1701
    %1703 = vrot.lane.b32.xlu0 %v1698, 124
    %v1704 = vpop.permute.xlu0 %1703
    %v1707 = vadd.f32 %v1695, %v1702
    %v1708 = vadd.f32 %v1696, %v1704
    %v1709 = vmul.f32 %v1258, %v601
    %v1710 = vmul.f32 %v1260, %v601
    %v1711 = vmul.f32 %v1262, %v601
    %v1715 = vrot.slane %v1709, 1
    %v1716 = vrot.slane %v1710, 1
    %v1717 = vsel %vm205, %v1715, %v1716
    %v1718 = vrot.slane %v1711, 1
    %v1719 = vsel %vm205, %v1716, %v1718
    %1720 = vrot.lane.b32.xlu0 %v1717, 124
    %v1721 = vpop.permute.xlu0 %1720
    %1722 = vrot.lane.b32.xlu0 %v1719, 124
    %v1723 = vpop.permute.xlu0 %1722
    %v1726 = vadd.f32 %v1707, %v1721
    %v1727 = vadd.f32 %v1708, %v1723
    %v1728 = vmul.f32 %v1258, %v625
    %v1729 = vmul.f32 %v1260, %v625
    %v1730 = vmul.f32 %v1262, %v625
    %v1734 = vrot.slane %v1728, 2
    %v1735 = vrot.slane %v1729, 2
    %v1736 = vsel %vm247, %v1734, %v1735
    %v1737 = vrot.slane %v1730, 2
    %v1738 = vsel %vm247, %v1735, %v1737
    %1739 = vrot.lane.b32.xlu0 %v1736, 124
    %v1740 = vpop.permute.xlu0 %1739
    %1741 = vrot.lane.b32.xlu0 %v1738, 124
    %v1742 = vpop.permute.xlu0 %1741
    %v1745 = vadd.f32 %v1726, %v1740
    %v1746 = vadd.f32 %v1727, %v1742
    %v1747 = vmul.f32 %v1256, %v649
    %v1748 = vmul.f32 %v1258, %v649
    %v1749 = vmul.f32 %v1260, %v649
    %v1753 = vrot.slane %v1747, 6
    %v1754 = vrot.slane %v1748, 6
    %v1755 = vsel %vm93, %v1753, %v1754
    %v1756 = vrot.slane %v1749, 6
    %v1757 = vsel %vm93, %v1754, %v1756
    %1758 = vrot.lane.b32.xlu0 %v1755, 120
    %v1759 = vpop.permute.xlu0 %1758
    %1760 = vrot.lane.b32.xlu0 %v1757, 120
    %v1761 = vpop.permute.xlu0 %1760
    %v1764 = vadd.f32 %v1745, %v1759
    %v1765 = vadd.f32 %v1746, %v1761
    %v1766 = vmul.f32 %v1256, %v673
    %v1767 = vmul.f32 %v1258, %v673
    %v1768 = vmul.f32 %v1260, %v673
    %v1772 = vrot.slane %v1766, 7
    %v1773 = vrot.slane %v1767, 7
    %v1774 = vsel %vm136, %v1772, %v1773
    %v1775 = vrot.slane %v1768, 7
    %v1776 = vsel %vm136, %v1773, %v1775
    %1777 = vrot.lane.b32.xlu0 %v1774, 120
    %v1778 = vpop.permute.xlu0 %1777
    %1779 = vrot.lane.b32.xlu0 %v1776, 120
    %v1780 = vpop.permute.xlu0 %1779
    %v1783 = vadd.f32 %v1764, %v1778
    %v1784 = vadd.f32 %v1765, %v1780
    %v1785 = vmul.f32 %v1258, %v697
    %v1786 = vmul.f32 %v1260, %v697
    %1789 = vrot.lane.b32.xlu0 %v1785, 120
    %v1790 = vpop.permute.xlu0 %1789
    %1791 = vrot.lane.b32.xlu0 %v1786, 120
    %v1792 = vpop.permute.xlu0 %1791
    %v1795 = vadd.f32 %v1783, %v1790
    %v1796 = vadd.f32 %v1784, %v1792
    %v1797 = vmul.f32 %v1258, %v714
    %v1798 = vmul.f32 %v1260, %v714
    %v1799 = vmul.f32 %v1262, %v714
    %v1803 = vrot.slane %v1797, 1
    %v1804 = vrot.slane %v1798, 1
    %v1805 = vsel %vm205, %v1803, %v1804
    %v1806 = vrot.slane %v1799, 1
    %v1807 = vsel %vm205, %v1804, %v1806
    %1808 = vrot.lane.b32.xlu0 %v1805, 120
    %v1809 = vpop.permute.xlu0 %1808
    %1810 = vrot.lane.b32.xlu0 %v1807, 120
    %v1811 = vpop.permute.xlu0 %1810
    %v1814 = vadd.f32 %v1795, %v1809
    %v1815 = vadd.f32 %v1796, %v1811
    %v1816 = vmul.f32 %v1258, %v738
    %v1817 = vmul.f32 %v1260, %v738
    %v1818 = vmul.f32 %v1262, %v738
    %v1822 = vrot.slane %v1816, 2
    %v1823 = vrot.slane %v1817, 2
    %v1824 = vsel %vm247, %v1822, %v1823
    %v1825 = vrot.slane %v1818, 2
    %v1826 = vsel %vm247, %v1823, %v1825
    %1827 = vrot.lane.b32.xlu0 %v1824, 120
    %v1828 = vpop.permute.xlu0 %1827
    %1829 = vrot.lane.b32.xlu0 %v1826, 120
    %v1830 = vpop.permute.xlu0 %1829
    %v1833 = vadd.f32 %v1814, %v1828
    %v1834 = vadd.f32 %v1815, %v1830
    %1835 = vst.msk [vmem:[#allocation2 + $0x38] sm:$0xff] %vm61, %v1833
    %1836 = vst.msk [vmem:[#allocation2 + $0x50] sm:$0xff] %vm61, %v1834
    %v1837 = vld [vmem:[#allocation2 + $0x30] sm:$0xff]
    %v1838 = vld [vmem:[#allocation2 + $0x38] sm:$0xff]
    %v1839 = vld [vmem:[#allocation2 + $0x48] sm:$0xff]
    %v1840 = vld [vmem:[#allocation2 + $0x50] sm:$0xff]
    %v1841 = vld [vmem:[%s3] sm:$0xff]
    %v1842 = vld [vmem:[%s3 + $0x8] sm:$0xff]
    %v1843 = vld [vmem:[%s3 + $0x10] sm:$0xff]
    %v1844 = vld [vmem:[%s3 + $0x18] sm:$0xff]
    %v1845 = vld [vmem:[%s3 + $0x20] sm:$0xff]
    %v1846 = vld [vmem:[%s3 + $0x28] sm:$0xff]
    %v1847 = vld [vmem:[%s3 + $0x30] sm:$0xff]
    %v1848 = vld [vmem:[%s3 + $0x38] sm:$0xff]
    %v1849 = vld [vmem:[%s3 + $0x40] sm:$0xff]
    %v1850 = vld [vmem:[%s3 + $0x48] sm:$0xff]
    %v1851 = vld [vmem:[%s3 + $0x50] sm:$0xff]
    %v1852 = vld [vmem:[%s3 + $0x58] sm:$0xff]
    %v1853 = vld [vmem:[%s3 + $0x60] sm:$0xff]
    %v1854 = vld [vmem:[%s3 + $0x68] sm:$0xff]
    %v1855 = vld [vmem:[%s3 + $0x70] sm:$0xff]
    %v1856 = vld [vmem:[%s3 + $0x78] sm:$0xff]
    %v1857 = vld [vmem:[%s3 + $0x80] sm:$0xff]
    %v1858 = vld [vmem:[%s4] sm:$0x1]
    %v1860 = vperm.slane %v1858, 0
    %1866 = vrot.lane.b32.xlu0 %v1837, 36
    %v1867 = vpop.permute.xlu0 %1866
    %1868 = vrot.lane.b32.xlu0 %v1838, 36
    %v1869 = vpop.permute.xlu0 %1868
    %1870 = vrot.lane.b32.xlu0 %v1839, 36
    %v1871 = vpop.permute.xlu0 %1870
    %1872 = vrot.lane.b32.xlu0 %v1840, 36
    %v1873 = vpop.permute.xlu0 %1872
    %v1874 = vsel %vm798, %v1867, %v1869
    %v1875 = vsel %vm798, %v1871, %v1873
    %v1878 = vsel %vm112, %v1869, 0
    %v1880 = vsel %vm112, %v1873, 0
    %1882 = vmatpush.msra.mxu0 %v1856
    %1883 = vmatpush.msra.mxu0 %v1855
    %1884 = vmatpush.msra.mxu0 %v1854
    %1885 = vmatpush.msra.mxu0 %v1853
    %1886 = vmatpush.msra.mxu0 %v1852
    %1887 = vmatpush.msra.mxu0 %v1851
    %1888 = vmatpush.msra.mxu0 %v1850
    %1889 = vmatpush.msra.mxu0 %v1849
    %1890 = vmatpush.msra.mxu0 %v1848
    %1891 = vmatpush.msra.mxu0 %v1847
    %1892 = vmatpush.msra.mxu0 %v1846
    %1893 = vmatpush.msra.mxu0 %v1845
    %1894 = vmatpush.msra.mxu0 %v1844
    %1895 = vmatpush.msra.mxu0 %v1843
    %1896 = vmatpush.msra.mxu0 %v1842
    %1897 = vmatpush.msra.mxu0 %v1841
    %1898 = vmatmul.f32.gmra.mxu0 %v1874
    %v1899 = vpop.f32.mrf.mxu0
    %v1900 = vadd.f32 %v1860, %v1899
    %1901 = vmatmul.f32.gmra.mxu0 %v1875
    %v1902 = vpop.f32.mrf.mxu0
    %v1903 = vadd.f32 %v1860, %v1902
    %1904 = vdwg.mxu0
    %1905 = vmatpush.msra.mxu0 0.0
    %1906 = vmatpush.msra.mxu0 0.0
    %1907 = vmatpush.msra.mxu0 0.0
    %1908 = vmatpush.msra.mxu0 0.0
    %1909 = vmatpush.msra.mxu0 0.0
    %1910 = vmatpush.msra.mxu0 0.0
    %1911 = vmatpush.msra.mxu0 0.0
    %1912 = vmatpush.msra.mxu0 0.0
    %1913 = vmatpush.msra.mxu0 0.0
    %1914 = vmatpush.msra.mxu0 0.0
    %1915 = vmatpush.msra.mxu0 0.0
    %1916 = vmatpush.msra.mxu0 0.0
    %1917 = vmatpush.msra.mxu0 0.0
    %1918 = vmatpush.msra.mxu0 0.0
    %1919 = vmatpush.msra.mxu0 0.0
    %1920 = vmatpush.msra.mxu0 %v1857
    %1921 = vmatmul.f32.gmra.mxu0 %v1878
    %v1922 = vpop.f32.mrf.mxu0
    %v1923 = vadd.f32 %v1900, %v1922
    %1924 = vmatmul.f32.gmra.mxu0 %v1880
    %v1925 = vpop.f32.mrf.mxu0
    %v1926 = vadd.f32 %v1903, %v1925
    %1927 = vdwg.mxu0
    %1928 = vst.msk [vmem:[#allocation2 + $0x38] sm:$0xff] %vm61, %v1923
    %1929 = vst.msk [vmem:[#allocation2 + $0x50] sm:$0xff] %vm61, %v1926
    %v1930 = vld [vmem:[%s6] sm:$0x1]
    %v1932 = vperm.slane %v1930, 0
    %v1934 = vld [vmem:[#allocation2 + $0x8] sm:$0x80]
    %v1935 = vld [vmem:[#allocation2 + $0x20] sm:$0xff]
    %v1936 = vld [vmem:[#allocation2 + $0x38] sm:$0x7f]
    %v1937 = vmul.f32 %v1934, %v862
    %v1938 = vmul.f32 %v1935, %v862
    %v1939 = vmul.f32 %v1936, %v862
    %v1940 = vadd.f32 %v1932, %v1937
    %v1941 = vadd.f32 %v1932, %v1938
    %v1942 = vadd.f32 %v1932, %v1939
    %v1943 = vld [vmem:[#allocation2 + $0x38] sm:$0xff]
    %v1944 = vmul.f32 %v1935, %v870
    %v1945 = vmul.f32 %v1943, %v870
    %v1948 = vrot.slane %v1944, 1
    %v1949 = vrot.slane %v1945, 1
    %v1950 = vsel %vm205, %v1948, %v1949
    %v1954 = vadd.f32 %v1940, %v1948
    %v1955 = vadd.f32 %v1941, %v1950
    %v1956 = vadd.f32 %v1942, %v1949
    %v1957 = vld [vmem:[#allocation2 + $0x20] sm:$0xfe]
    %v1958 = vld [vmem:[#allocation2 + $0x50] sm:$0x1]
    %v1959 = vmul.f32 %v1957, %v886
    %v1960 = vmul.f32 %v1943, %v886
    %v1961 = vmul.f32 %v1958, %v886
    %v1965 = vrot.slane %v1959, 2
    %v1966 = vrot.slane %v1960, 2
    %v1967 = vsel %vm247, %v1965, %v1966
    %v1968 = vrot.slane %v1961, 2
    %v1969 = vsel %vm247, %v1966, %v1968
    %v1973 = vadd.f32 %v1954, %v1965
    %v1974 = vadd.f32 %v1955, %v1967
    %v1975 = vadd.f32 %v1956, %v1969
    %v1976 = vld [vmem:[#allocation2 + $0x20] sm:$0xfc]
    %v1977 = vld [vmem:[#allocation2 + $0x50] sm:$0x3]
    %v1978 = vmul.f32 %v1976, %v906
    %v1979 = vmul.f32 %v1943, %v906
    %v1980 = vmul.f32 %v1977, %v906
    %v1984 = vrot.slane %v1978, 3
    %v1985 = vrot.slane %v1979, 3
    %v1986 = vsel %vm913, %v1984, %v1985
    %v1987 = vrot.slane %v1980, 3
    %v1988 = vsel %vm913, %v1985, %v1987
    %v1992 = vadd.f32 %v1973, %v1984
    %v1993 = vadd.f32 %v1974, %v1986
    %v1994 = vadd.f32 %v1975, %v1988
    %v1995 = vld [vmem:[#allocation2 + $0x20] sm:$0xf8]
    %v1996 = vld [vmem:[#allocation2 + $0x50] sm:$0x7]
    %v1997 = vmul.f32 %v1995, %v927
    %v1998 = vmul.f32 %v1943, %v927
    %v1999 = vmul.f32 %v1996, %v927
    %v2003 = vrot.slane %v1997, 4
    %v2004 = vrot.slane %v1998, 4
    %v2005 = vsel %vm934, %v2003, %v2004
    %v2006 = vrot.slane %v1999, 4
    %v2007 = vsel %vm934, %v2004, %v2006
    %v2011 = vadd.f32 %v1992, %v2003
    %v2012 = vadd.f32 %v1993, %v2005
    %v2013 = vadd.f32 %v1994, %v2007
    %v2014 = vld [vmem:[#allocation2 + $0x20] sm:$0xf0]
    %v2015 = vld [vmem:[#allocation2 + $0x50] sm:$0xf]
    %v2016 = vmul.f32 %v2014, %v948
    %v2017 = vmul.f32 %v1943, %v948
    %v2018 = vmul.f32 %v2015, %v948
    %v2022 = vrot.slane %v2016, 5
    %v2023 = vrot.slane %v2017, 5
    %v2024 = vsel %vm955, %v2022, %v2023
    %v2025 = vrot.slane %v2018, 5
    %v2026 = vsel %vm955, %v2023, %v2025
    %v2030 = vadd.f32 %v2011, %v2022
    %v2031 = vadd.f32 %v2012, %v2024
    %v2032 = vadd.f32 %v2013, %v2026
    %v2033 = vld [vmem:[#allocation2 + $0x20] sm:$0xe0]
    %v2034 = vld [vmem:[#allocation2 + $0x50] sm:$0x1f]
    %v2035 = vmul.f32 %v2033, %v969
    %v2036 = vmul.f32 %v1943, %v969
    %v2037 = vmul.f32 %v2034, %v969
    %v2041 = vrot.slane %v2035, 6
    %v2042 = vrot.slane %v2036, 6
    %v2043 = vsel %vm93, %v2041, %v2042
    %v2044 = vrot.slane %v2037, 6
    %v2045 = vsel %vm93, %v2042, %v2044
    %v2049 = vadd.f32 %v2030, %v2041
    %v2050 = vadd.f32 %v2031, %v2043
    %v2051 = vadd.f32 %v2032, %v2045
    %v2052 = vld [vmem:[#allocation2 + $0x20] sm:$0xc0]
    %v2053 = vld [vmem:[#allocation2 + $0x50] sm:$0x3f]
    %v2054 = vmul.f32 %v2052, %v989
    %v2055 = vmul.f32 %v1943, %v989
    %v2056 = vmul.f32 %v2053, %v989
    %v2060 = vrot.slane %v2054, 7
    %v2061 = vrot.slane %v2055, 7
    %v2062 = vsel %vm136, %v2060, %v2061
    %v2063 = vrot.slane %v2056, 7
    %v2064 = vsel %vm136, %v2061, %v2063
    %v2068 = vadd.f32 %v2049, %v2060
    %v2069 = vadd.f32 %v2050, %v2062
    %v2070 = vadd.f32 %v2051, %v2064
    %v2071 = vld [vmem:[#allocation2 + $0x20] sm:$0x80]
    %v2072 = vld [vmem:[#allocation2 + $0x50] sm:$0x7f]
    %v2073 = vmul.f32 %v2071, %v1009
    %v2074 = vmul.f32 %v1943, %v1009
    %v2075 = vmul.f32 %v2072, %v1009
    %v2076 = vadd.f32 %v2068, %v2073
    %v2077 = vadd.f32 %v2069, %v2074
    %v2078 = vadd.f32 %v2070, %v2075
    %v2079 = vld [vmem:[#allocation2 + $0x50] sm:$0xff]
    %v2080 = vmul.f32 %v1943, %v1017
    %v2081 = vmul.f32 %v2079, %v1017
    %v2084 = vrot.slane %v2080, 1
    %v2085 = vrot.slane %v2081, 1
    %v2086 = vsel %vm205, %v2084, %v2085
    %v2090 = vadd.f32 %v2076, %v2084
    %v2091 = vadd.f32 %v2077, %v2086
    %v2092 = vadd.f32 %v2078, %v2085
    %v2093 = vld [vmem:[#allocation2 + $0x38] sm:$0xfe]
    %v2094 = vld [vmem:[#allocation2 + $0x68] sm:$0x1]
    %v2095 = vmul.f32 %v2093, %v1033
    %v2096 = vmul.f32 %v2079, %v1033
    %v2097 = vmul.f32 %v2094, %v1033
    %v2101 = vrot.slane %v2095, 2
    %v2102 = vrot.slane %v2096, 2
    %v2103 = vsel %vm247, %v2101, %v2102
    %v2104 = vrot.slane %v2097, 2
    %v2105 = vsel %vm247, %v2102, %v2104
    %v2109 = vadd.f32 %v2090, %v2101
    %v2110 = vadd.f32 %v2091, %v2103
    %v2111 = vadd.f32 %v2092, %v2105
    %v2112 = vld [vmem:[#allocation2 + $0x38] sm:$0xfc]
    %v2113 = vld [vmem:[#allocation2 + $0x68] sm:$0x3]
    %v2114 = vmul.f32 %v2112, %v1053
    %v2115 = vmul.f32 %v2079, %v1053
    %v2116 = vmul.f32 %v2113, %v1053
    %v2120 = vrot.slane %v2114, 3
    %v2121 = vrot.slane %v2115, 3
    %v2122 = vsel %vm913, %v2120, %v2121
    %v2123 = vrot.slane %v2116, 3
    %v2124 = vsel %vm913, %v2121, %v2123
    %v2128 = vadd.f32 %v2109, %v2120
    %v2129 = vadd.f32 %v2110, %v2122
    %v2130 = vadd.f32 %v2111, %v2124
    %v2131 = vld [vmem:[#allocation2 + $0x38] sm:$0xf8]
    %v2132 = vld [vmem:[#allocation2 + $0x68] sm:$0x7]
    %v2133 = vmul.f32 %v2131, %v1073
    %v2134 = vmul.f32 %v2079, %v1073
    %v2135 = vmul.f32 %v2132, %v1073
    %v2139 = vrot.slane %v2133, 4
    %v2140 = vrot.slane %v2134, 4
    %v2141 = vsel %vm934, %v2139, %v2140
    %v2142 = vrot.slane %v2135, 4
    %v2143 = vsel %vm934, %v2140, %v2142
    %v2147 = vadd.f32 %v2128, %v2139
    %v2148 = vadd.f32 %v2129, %v2141
    %v2149 = vadd.f32 %v2130, %v2143
    %v2150 = vld [vmem:[#allocation2 + $0x38] sm:$0xf0]
    %v2151 = vld [vmem:[#allocation2 + $0x68] sm:$0xf]
    %v2152 = vmul.f32 %v2150, %v1093
    %v2153 = vmul.f32 %v2079, %v1093
    %v2154 = vmul.f32 %v2151, %v1093
    %v2158 = vrot.slane %v2152, 5
    %v2159 = vrot.slane %v2153, 5
    %v2160 = vsel %vm955, %v2158, %v2159
    %v2161 = vrot.slane %v2154, 5
    %v2162 = vsel %vm955, %v2159, %v2161
    %v2166 = vadd.f32 %v2147, %v2158
    %v2167 = vadd.f32 %v2148, %v2160
    %v2168 = vadd.f32 %v2149, %v2162
    %v2169 = vld [vmem:[#allocation2 + $0x38] sm:$0xe0]
    %v2170 = vld [vmem:[#allocation2 + $0x68] sm:$0x1f]
    %v2171 = vmul.f32 %v2169, %v1113
    %v2172 = vmul.f32 %v2079, %v1113
    %v2173 = vmul.f32 %v2170, %v1113
    %v2177 = vrot.slane %v2171, 6
    %v2178 = vrot.slane %v2172, 6
    %v2179 = vsel %vm93, %v2177, %v2178
    %v2180 = vrot.slane %v2173, 6
    %v2181 = vsel %vm93, %v2178, %v2180
    %v2185 = vadd.f32 %v2166, %v2177
    %v2186 = vadd.f32 %v2167, %v2179
    %v2187 = vadd.f32 %v2168, %v2181
    %v2188 = vld [vmem:[#allocation2 + $0x38] sm:$0xc0]
    %v2189 = vld [vmem:[#allocation2 + $0x68] sm:$0x3f]
    %v2190 = vmul.f32 %v2188, %v1133
    %v2191 = vmul.f32 %v2079, %v1133
    %v2192 = vmul.f32 %v2189, %v1133
    %v2196 = vrot.slane %v2190, 7
    %v2197 = vrot.slane %v2191, 7
    %v2198 = vsel %vm136, %v2196, %v2197
    %v2199 = vrot.slane %v2192, 7
    %v2200 = vsel %vm136, %v2197, %v2199
    %v2204 = vadd.f32 %v2185, %v2196
    %v2205 = vadd.f32 %v2186, %v2198
    %v2206 = vadd.f32 %v2187, %v2200
    %v2207 = vld [vmem:[#allocation2 + $0x38] sm:$0x80]
    %v2208 = vld [vmem:[#allocation2 + $0x68] sm:$0x7f]
    %v2209 = vmul.f32 %v2207, %v1153
    %v2210 = vmul.f32 %v2079, %v1153
    %v2211 = vmul.f32 %v2208, %v1153
    %v2212 = vadd.f32 %v2204, %v2209
    %v2213 = vadd.f32 %v2205, %v2210
    %v2214 = vadd.f32 %v2206, %v2211
    %v2215 = vld [vmem:[#allocation2 + $0x68] sm:$0xff]
    %v2216 = vmul.f32 %v2079, %v1161
    %v2217 = vmul.f32 %v2215, %v1161
    %v2220 = vrot.slane %v2216, 1
    %v2221 = vrot.slane %v2217, 1
    %v2222 = vsel %vm205, %v2220, %v2221
    %v2226 = vadd.f32 %v2212, %v2220
    %v2227 = vadd.f32 %v2213, %v2222
    %v2228 = vadd.f32 %v2214, %v2221
    %v2229 = vld [vmem:[#allocation2 + $0x50] sm:$0xfe]
    %v2230 = vld [vmem:[#allocation2 + $0x80] sm:$0x1]
    %v2231 = vmul.f32 %v2229, %v1177
    %v2232 = vmul.f32 %v2215, %v1177
    %v2233 = vmul.f32 %v2230, %v1177
    %v2237 = vrot.slane %v2231, 2
    %v2238 = vrot.slane %v2232, 2
    %v2239 = vsel %vm247, %v2237, %v2238
    %v2240 = vrot.slane %v2233, 2
    %v2241 = vsel %vm247, %v2238, %v2240
    %v2245 = vadd.f32 %v2226, %v2237
    %v2246 = vadd.f32 %v2227, %v2239
    %v2247 = vadd.f32 %v2228, %v2241
    %v2248 = vld [vmem:[%s7] sm:$0xff]
    %v2249 = vld [vmem:[%s7 + $0x8] sm:$0xff]
    %v2250 = vld [vmem:[%s7 + $0x10] sm:$0xff]
    %v2251 = vld [vmem:[%s7 + $0x18] sm:$0xff]
    %v2252 = vld [vmem:[%s7 + $0x20] sm:$0xff]
    %v2253 = vld [vmem:[%s7 + $0x28] sm:$0xff]
    %v2254 = vld [vmem:[%s7 + $0x30] sm:$0xff]
    %v2255 = vld [vmem:[%s7 + $0x38] sm:$0xff]
    %v2256 = vld [vmem:[%s8] sm:$0x1]
    %v2258 = vperm.slane %v2256, 0
    %v2263 = vrot.slane %v2245, 7
    %v2264 = vrot.slane %v2246, 7
    %v2265 = vsel %vm136, %v2263, %v2264
    %v2266 = vrot.slane %v2247, 7
    %v2267 = vsel %vm136, %v2264, %v2266
    %v2268 = vsel %vm61, %v2265, 0
    %v2270 = vsel %vm61, %v2267, 0
    %2272 = vmatpush.msra.mxu0 0.0
    %2273 = vmatpush.msra.mxu0 0.0
    %2274 = vmatpush.msra.mxu0 0.0
    %2275 = vmatpush.msra.mxu0 0.0
    %2276 = vmatpush.msra.mxu0 0.0
    %2277 = vmatpush.msra.mxu0 0.0
    %2278 = vmatpush.msra.mxu0 0.0
    %2279 = vmatpush.msra.mxu0 0.0
    %2280 = vmatpush.msra.mxu0 %v2255
    %2281 = vmatpush.msra.mxu0 %v2254
    %2282 = vmatpush.msra.mxu0 %v2253
    %2283 = vmatpush.msra.mxu0 %v2252
    %2284 = vmatpush.msra.mxu0 %v2251
    %2285 = vmatpush.msra.mxu0 %v2250
    %2286 = vmatpush.msra.mxu0 %v2249
    %2287 = vmatpush.msra.mxu0 %v2248
    %2288 = vmatmul.f32.gmra.mxu0 %v2268
    %v2289 = vpop.f32.mrf.mxu0
    %v2290 = vadd.f32 %v2258, %v2289
    %2291 = vmatmul.f32.gmra.mxu0 %v2270
    %v2292 = vpop.f32.mrf.mxu0
    %v2293 = vadd.f32 %v2258, %v2292
    %2294 = vdwg.mxu0
    %v2295 = vmul.f32 %v1247, %v2290
    %v2296 = vmul.f32 %v1248, %v2293
    %s2297 = scalar_lea.vmem [#allocation3], 16
    %2298 = vst.msk [vmem:[%s2297] sm:$0xff] %vm61, %v2295
    %2299 = vst.msk [vmem:[%s2297 + $0x8] sm:$0xff] %vm61, %v2296
    // Predicated region
    $region38: #{tpu_custom_call.1} parent=1 // pred_check
      _
    $region39: #{tpu_custom_call.1} parent=1 // pred_check_branch
      %2301 = sbr.rel (0) target = $region41
    $region40: #{tpu_custom_call.1} parent=1 // pred_region
      %2303 = vsyncadd [#allocation4], 0
      %s2304 = sshll.u32 [#allocation3], 4
      %s2305 = int_to_ptr.vmem [resolvable:$true] %s2304
      %s2306 = sshll.u32 %s9, 4
      %s2307 = int_to_ptr.hbm [resolvable:$true] %s2306
      %2312 = dma.vmem_to_hbm [thread:$0]  %s2305, 512, %s2307, [#allocation4], 128, 128, 8
    $region41: #{tpu_custom_call.1} parent=1 // pred_fallthru
      _
    // Predicated region
    $region42: #{tpu_custom_call.1} parent=1 // pred_check
      _
    $region43: #{tpu_custom_call.1} parent=1 // pred_check_branch
      %2314 = sbr.rel (0) target = $region45
    $region44: #{tpu_custom_call.1} parent=1 // pred_region
      %2316 = dma.done [#allocation4], 512
    $region45: #{tpu_custom_call.1} parent=1 // pred_fallthru
      _
    %2317 = vsyncpa [#allocation4], 1

</llo_original>
